<compile_context>
chip_gen: v7x
topology: tpu7x:2x2x1
jax: 0.10.0
libtpu: 0.0.40
codegen_flags: <defaults>
</compile_context>

<pallas_src>
import jax
import jax.numpy as jnp
from jax import lax
from jax.experimental import pallas as pl
from jax.experimental.pallas import tpu as pltpu

BN_EPS = 1e-5


def _scr3_kernel(x_ref,                       # (N, C)  window-position-major rows
                 w_theta_ref, b_theta_ref,    # (C, I), (1, I)
                 w_pg_ref, b_pg_ref,          # (C, 2I), (1, 2I)   phi|g fused
                 w_out_ref, b_out_ref,        # (I, C), (1, C)     BN folded in
                 out_ref,                     # (tq, C)
                 phi_sc, g_sc):               # VMEM scratch (N', I) each
    q = pl.program_id(1)
    n_pool, inter = phi_sc.shape
    tq = out_ref.shape[0]

    # --- once per batch element: fused phi|g projection + 2x2 max-pool -------
    @pl.when(q == 0)
    def _init_kv():
        pg = jnp.dot(x_ref[...], w_pg_ref[...],
                     preferred_element_type=jnp.float32)          # (N, 2I)
        # rows are ordered [window-position k, window index], so max-pool is a
        # max over the four contiguous (N', 2I) slabs (VPU, no gather).
        pooled = jnp.maximum(
            jnp.maximum(pg[0 * n_pool:1 * n_pool], pg[1 * n_pool:2 * n_pool]),
            jnp.maximum(pg[2 * n_pool:3 * n_pool], pg[3 * n_pool:4 * n_pool]))
        pooled = pooled + b_pg_ref[...]       # bias once, after the max
        phi_sc[...] = pooled[:, :inter]
        g_sc[...] = pooled[:, inter:]

    # --- per query tile -------------------------------------------------------
    row0 = pl.multiple_of(q * tq, tq)
    x_tile = x_ref[pl.ds(row0, tq), :]                            # (tq, C)

    theta = jnp.dot(x_tile, w_theta_ref[...],
                    preferred_element_type=jnp.float32) + b_theta_ref[...]

    # scores: theta @ phi^T  -> (tq, N')
    f = pl.dot(theta, phi_sc[...], trans_b=True)
    f = f - jnp.max(f, axis=-1, keepdims=True)
    p = jnp.exp(f)
    s = jnp.sum(p, axis=-1, keepdims=True)

    # normalize after the attention-value matmul (divide on (tq, I), not (tq, N'))
    y = jnp.dot(p, g_sc[...], preferred_element_type=jnp.float32)  # (tq, I)
    y = y * pl.reciprocal(s, approx=False)

    # output 1x1 conv with folded BatchNorm, then residual add.
    wy = jnp.dot(y, w_out_ref[...],
                 preferred_element_type=jnp.float32) + b_out_ref[...]
    out_ref[...] = (wy + x_tile).astype(out_ref.dtype)


def _pick_query_tile(n):
    """Largest multiple-of-8 tile <= 256 that divides N with >= 2 tiles."""
    for t in (256, 128, 64, 32, 16, 8):
        if n % t == 0 and n // t >= 2:
            return t
    return n   # fall back to a single full-N block


def _vmem_limit_bytes(n, n_pool, c, inter, tq):
    f = 4  # float32
    need = (2 * n * c                 # resident x block (double-buffered alloc)
            + 2 * 2 * tq * c          # output tile double buffer
            + 2 * n_pool * inter      # phi/g scratch
            + 3 * tq * n_pool         # score / exp temporaries
            + tq * 4 * inter          # theta / y temporaries
            + 2 * (3 * c * inter + inter * c + 4 * c + 4 * inter)) * f
    need += 8 << 20                   # headroom for layout padding / compiler temps
    return int(min(max(need, 16 << 20), 48 << 20))   # stays safe on v7x (64 MiB)


def self_correlation_computation3(x_nchw, params):
    """x_nchw: (B, C, H, W) float32 (PyTorch NCHW). Returns (B, C, H, W)."""
    B, C, H, W = x_nchw.shape
    assert H % 2 == 0 and W % 2 == 0, "2x2 max-pool sub-sampling needs even H, W"
    inter = params["w_theta"].shape[1]
    N = H * W
    Np = N // 4
    tq = _pick_query_tile(N)
    nq = N // tq

    # window-position-major layout: row = (2*(h%2)+(w%2)) * N' + (h//2)*(W//2)+(w//2)
    x_nhwc = jnp.transpose(x_nchw, (0, 2, 3, 1))                       # (B,H,W,C)
    x_perm = jnp.transpose(
        x_nhwc.reshape(B, H // 2, 2, W // 2, 2, C),
        (0, 2, 4, 1, 3, 5)).reshape(B, N, C)

    # Fold eval-mode BatchNorm into the W conv; fuse phi|g projections.
    scale = params["bn_gamma"] * lax.rsqrt(params["bn_var"] + BN_EPS)  # (1, C)
    w_out = params["w_W"] * scale                                      # (I, C)
    b_out = (params["b_W"] - params["bn_mean"]) * scale + params["bn_beta"]
    w_pg = jnp.concatenate([params["w_phi"], params["w_g"]], axis=1)   # (C, 2I)
    b_pg = jnp.concatenate([params["b_phi"], params["b_g"]], axis=1)   # (1, 2I)

    weights = (params["w_theta"], params["b_theta"], w_pg, b_pg, w_out, b_out)

    def const_spec(shape):
        nd = len(shape)
        return pl.BlockSpec(shape, lambda b, q, _nd=nd: (0,) * _nd)

    out_perm = pl.pallas_call(
        _scr3_kernel,
        out_shape=jax.ShapeDtypeStruct((B, N, C), x_nchw.dtype),
        grid_spec=pltpu.PrefetchScalarGridSpec(
            num_scalar_prefetch=0,
            grid=(B, nq),
            in_specs=[
                # full x per batch element; constant over q => stays resident
                pl.BlockSpec((None, N, C), lambda b, q: (b, 0, 0)),
            ] + [const_spec(w.shape) for w in weights],
            out_specs=pl.BlockSpec((None, tq, C), lambda b, q: (b, q, 0)),
            scratch_shapes=[pltpu.VMEM((Np, inter), jnp.float32),   # phi pooled
                            pltpu.VMEM((Np, inter), jnp.float32)],  # g pooled
        ),
        compiler_params=pltpu.CompilerParams(
            dimension_semantics=("parallel", "arbitrary"),
            vmem_limit_bytes=_vmem_limit_bytes(N, Np, C, inter, tq)),
    )(x_perm, *weights)

    # undo the window-position-major permutation
    out = out_perm.reshape(B, 2, 2, H // 2, W // 2, C)
    out = jnp.transpose(out, (0, 3, 1, 4, 2, 5)).reshape(B, H, W, C)
    return jnp.transpose(out, (0, 3, 1, 2))


def make_params(key, in_channels, inter_channels=None):
    """Deterministic parameter init matching SelfCorrelationComputation3.__init__.

    1x1 conv weights stored as (C_in, C_out) (transposed w.r.t. torch's
    (C_out, C_in, 1, 1)); biases stored as (1, C_out).
    BatchNorm gamma/beta are explicitly zero-initialized per the module.
    """
    if inter_channels is None:
        inter_channels = max(in_channels // 2, 1)
    C, I = in_channels, inter_channels
    ks = jax.random.split(key, 8)
    f32 = jnp.float32
    return {
        "w_theta": (0.2 * jax.random.normal(ks[0], (C, I))).astype(f32),
        "b_theta": (0.1 * jax.random.normal(ks[1], (1, I))).astype(f32),
        "w_phi":   (0.2 * jax.random.normal(ks[2], (C, I))).astype(f32),
        "b_phi":   (0.1 * jax.random.normal(ks[3], (1, I))).astype(f32),
        "w_g":     (0.2 * jax.random.normal(ks[4], (C, I))).astype(f32),
        "b_g":     (0.1 * jax.random.normal(ks[5], (1, I))).astype(f32),
        "w_W":     (0.2 * jax.random.normal(ks[6], (I, C))).astype(f32),
        "b_W":     (0.1 * jax.random.normal(ks[7], (1, C))).astype(f32),
        # nn.init.constant_(W[1].weight, 0); nn.init.constant_(W[1].bias, 0)
        "bn_gamma": jnp.zeros((1, C), f32),
        "bn_beta":  jnp.zeros((1, C), f32),
        "bn_mean":  jnp.zeros((1, C), f32),   # BatchNorm running stats (eval mode)
        "bn_var":   jnp.ones((1, C), f32),
    }


def reference_forward(x_nchw, params):
    """Pure-JAX reference mirroring the PyTorch forward (eval-mode BN)."""
    B, C, H, W = x_nchw.shape
    inter = params["w_theta"].shape[1]
    x = jnp.transpose(x_nchw, (0, 2, 3, 1))                              # (B,H,W,C)

    theta = x @ params["w_theta"] + params["b_theta"]                    # (B,H,W,I)
    phi = x @ params["w_phi"] + params["b_phi"]
    g = x @ params["w_g"] + params["b_g"]

    def pool(t):
        b, h, w, c = t.shape
        return jnp.max(t.reshape(b, h // 2, 2, w // 2, 2, c), axis=(2, 4))

    theta_f = theta.reshape(B, H * W, inter)
    phi_p = pool(phi).reshape(B, -1, inter)
    g_p = pool(g).reshape(B, -1, inter)

    f = jnp.einsum("bni,bmi->bnm", theta_f, phi_p)
    attn = jax.nn.softmax(f, axis=-1)
    y = jnp.einsum("bnm,bmi->bni", attn, g_p)                            # (B,N,I)

    wy = y @ params["w_W"] + params["b_W"]                               # (B,N,C)
    wy = (wy - params["bn_mean"]) * lax.rsqrt(params["bn_var"] + BN_EPS) \
         * params["bn_gamma"] + params["bn_beta"]
    z = wy + x.reshape(B, H * W, C)
    return jnp.transpose(z.reshape(B, H, W, C), (0, 3, 1, 2))


if __name__ == "__main__":
    key = jax.random.PRNGKey(0)
    k_x, k_p, k_bn = jax.random.split(key, 3)

    B, C, H, W = 2, 4, 16, 16
    x = jax.random.normal(k_x, (B, C, H, W), dtype=jnp.float32)
    params = make_params(k_p, in_channels=C)

    # Module-faithful init zeroes BN gamma/beta, which zeroes the whole attention
    # branch and would make the check degenerate (out == x).  Use nonzero
    # eval-mode BN stats/affine so the full compute path is actually validated.
    kb = jax.random.split(k_bn, 4)
    params["bn_gamma"] = (0.5 + 0.1 * jax.random.normal(kb[0], (1, C))).astype(jnp.float32)
    params["bn_beta"] = (0.1 * jax.random.normal(kb[1], (1, C))).astype(jnp.float32)
    params["bn_mean"] = (0.1 * jax.random.normal(kb[2], (1, C))).astype(jnp.float32)
    params["bn_var"] = (1.0 + 0.2 * jax.random.uniform(kb[3], (1, C))).astype(jnp.float32)

    out = self_correlation_computation3(x, params)
    out = jax.block_until_ready(out)

    ref = reference_forward(x, params)
    assert out.shape == (B, C, H, W)
    max_err = float(jnp.max(jnp.abs(out - ref)))
    assert jnp.allclose(out, ref, atol=1e-4, rtol=1e-4), \
        f"mismatch vs JAX reference (max abs err {max_err})"

    print("KERNEL_OK")
</pallas_src>

<mosaic_0001>
module attributes {stable_mosaic.version = 11 : i64} {
  func.func @_scr3_kernel(%arg0: i32, %arg1: i32, %arg2: memref<1x256x4xf32, #tpu.memory_space<vmem>>, %arg3: memref<4x2xf32, #tpu.memory_space<vmem>>, %arg4: memref<1x2xf32, #tpu.memory_space<vmem>>, %arg5: memref<4x4xf32, #tpu.memory_space<vmem>>, %arg6: memref<1x4xf32, #tpu.memory_space<vmem>>, %arg7: memref<2x4xf32, #tpu.memory_space<vmem>>, %arg8: memref<1x4xf32, #tpu.memory_space<vmem>>, %arg9: memref<1x128x4xf32, #tpu.memory_space<vmem>>, %arg10: memref<64x2xf32, #tpu.memory_space<vmem>>, %arg11: memref<64x2xf32, #tpu.memory_space<vmem>>) attributes {dimension_semantics = [#tpu.dimension_semantics<parallel>, #tpu.dimension_semantics<arbitrary>], iteration_bounds = array<i64: 2, 2>, scalar_prefetch = 0 : i64, scratch_operands = 2 : i64, tpu.core_type = #tpu.core_type<tc>, window_params = [{transform_indices = @transform_0, window_bounds = array<i64: 1, 256, 4>}, {pipeline_mode = #tpu.pipeline_mode<synchronous>, transform_indices = @transform_1, window_bounds = array<i64: 4, 2>}, {pipeline_mode = #tpu.pipeline_mode<synchronous>, transform_indices = @transform_2, window_bounds = array<i64: 1, 2>}, {pipeline_mode = #tpu.pipeline_mode<synchronous>, transform_indices = @transform_3, window_bounds = array<i64: 4, 4>}, {pipeline_mode = #tpu.pipeline_mode<synchronous>, transform_indices = @transform_4, window_bounds = array<i64: 1, 4>}, {pipeline_mode = #tpu.pipeline_mode<synchronous>, transform_indices = @transform_5, window_bounds = array<i64: 2, 4>}, {pipeline_mode = #tpu.pipeline_mode<synchronous>, transform_indices = @transform_6, window_bounds = array<i64: 1, 4>}, {transform_indices = @transform_7, window_bounds = array<i64: 1, 128, 4>}]} {
    %c0_i32 = arith.constant 0 : i32
    %0 = arith.cmpi eq, %arg1, %c0_i32 : i32
    %1 = arith.extui %0 : i1 to i32
    %c0_i32_0 = arith.constant 0 : i32
    %2 = arith.cmpi ne, %1, %c0_i32_0 : i32
    scf.if %2 {
      %c0_22 = arith.constant 0 : index
      %c0_23 = arith.constant 0 : index
      %c0_24 = arith.constant 0 : index
      %36 = vector.load %arg2[%c0_22, %c0_23, %c0_24] : memref<1x256x4xf32, #tpu.memory_space<vmem>>, vector<1x256x4xf32>
      %37 = vector.shape_cast %36 : vector<1x256x4xf32> to vector<256x4xf32>
      %c0_25 = arith.constant 0 : index
      %c0_26 = arith.constant 0 : index
      %38 = vector.load %arg5[%c0_25, %c0_26] : memref<4x4xf32, #tpu.memory_space<vmem>>, vector<4x4xf32>
      %cst_27 = arith.constant dense<0.000000e+00> : vector<256x4xf32>
      %39 = tpu.matmul %37, %38, %cst_27 {dimension_numbers = #tpu.dot_dimension_numbers<[1], [0], [0], [1], [0, 0, 1, 1], [], []>} : vector<256x4xf32>, vector<4x4xf32>, vector<256x4xf32> -> vector<256x4xf32>
      %40 = vector.extract_strided_slice %39 {offsets = [0, 0], sizes = [64, 4], strides = [1, 1]} : vector<256x4xf32> to vector<64x4xf32>
      %41 = vector.extract_strided_slice %39 {offsets = [64, 0], sizes = [64, 4], strides = [1, 1]} : vector<256x4xf32> to vector<64x4xf32>
      %42 = arith.maximumf %40, %41 : vector<64x4xf32>
      %43 = vector.extract_strided_slice %39 {offsets = [128, 0], sizes = [64, 4], strides = [1, 1]} : vector<256x4xf32> to vector<64x4xf32>
      %44 = vector.extract_strided_slice %39 {offsets = [192, 0], sizes = [64, 4], strides = [1, 1]} : vector<256x4xf32> to vector<64x4xf32>
      %45 = arith.maximumf %43, %44 : vector<64x4xf32>
      %46 = arith.maximumf %42, %45 : vector<64x4xf32>
      %c0_28 = arith.constant 0 : index
      %c0_29 = arith.constant 0 : index
      %47 = vector.load %arg6[%c0_28, %c0_29] : memref<1x4xf32, #tpu.memory_space<vmem>>, vector<1x4xf32>
      %48 = vector.broadcast %47 : vector<1x4xf32> to vector<64x4xf32>
      %49 = arith.addf %46, %48 : vector<64x4xf32>
      %50 = vector.extract_strided_slice %49 {offsets = [0, 0], sizes = [64, 2], strides = [1, 1]} : vector<64x4xf32> to vector<64x2xf32>
      %c0_30 = arith.constant 0 : index
      %c0_31 = arith.constant 0 : index
      %51 = vector.load %arg10[%c0_30, %c0_31] : memref<64x2xf32, #tpu.memory_space<vmem>>, vector<64x2xf32>
      tpu.vector_store %arg10[%c0_30, %c0_31], %50 {strides = array<i32>} : memref<64x2xf32, #tpu.memory_space<vmem>>, vector<64x2xf32>,
      %52 = vector.extract_strided_slice %49 {offsets = [0, 2], sizes = [64, 2], strides = [1, 1]} : vector<64x4xf32> to vector<64x2xf32>
      %c0_32 = arith.constant 0 : index
      %c0_33 = arith.constant 0 : index
      %53 = vector.load %arg11[%c0_32, %c0_33] : memref<64x2xf32, #tpu.memory_space<vmem>>, vector<64x2xf32>
      tpu.vector_store %arg11[%c0_32, %c0_33], %52 {strides = array<i32>} : memref<64x2xf32, #tpu.memory_space<vmem>>, vector<64x2xf32>,
    } else {
    }
    %c128_i32 = arith.constant 128 : i32
    %3 = arith.muli %arg1, %c128_i32 : i32
    %4 = tpu.assume_multiple %3, 128 : i32
    %c0 = arith.constant 0 : index
    %5 = arith.index_cast %4 : i32 to index
    %c0_1 = arith.constant 0 : index
    %6 = vector.load %arg2[%c0, %5, %c0_1] : memref<1x256x4xf32, #tpu.memory_space<vmem>>, vector<1x128x4xf32>
    %7 = vector.shape_cast %6 : vector<1x128x4xf32> to vector<128x4xf32>
    %c0_2 = arith.constant 0 : index
    %c0_3 = arith.constant 0 : index
    %8 = vector.load %arg3[%c0_2, %c0_3] : memref<4x2xf32, #tpu.memory_space<vmem>>, vector<4x2xf32>
    %cst = arith.constant dense<0.000000e+00> : vector<128x2xf32>
    %9 = tpu.matmul %7, %8, %cst {dimension_numbers = #tpu.dot_dimension_numbers<[1], [0], [0], [1], [0, 0, 1, 1], [], []>} : vector<128x4xf32>, vector<4x2xf32>, vector<128x2xf32> -> vector<128x2xf32>
    %c0_4 = arith.constant 0 : index
    %c0_5 = arith.constant 0 : index
    %10 = vector.load %arg4[%c0_4, %c0_5] : memref<1x2xf32, #tpu.memory_space<vmem>>, vector<1x2xf32>
    %11 = vector.broadcast %10 : vector<1x2xf32> to vector<128x2xf32>
    %12 = arith.addf %9, %11 : vector<128x2xf32>
    %c0_6 = arith.constant 0 : index
    %c0_7 = arith.constant 0 : index
    %13 = vector.load %arg10[%c0_6, %c0_7] : memref<64x2xf32, #tpu.memory_space<vmem>>, vector<64x2xf32>
    %cst_8 = arith.constant dense<0.000000e+00> : vector<128x64xf32>
    %14 = tpu.matmul %12, %13, %cst_8 {dimension_numbers = #tpu.dot_dimension_numbers<[1], [1], [0], [0], [0, 0, 1, 0], [], []>} : vector<128x2xf32>, vector<64x2xf32>, vector<128x64xf32> -> vector<128x64xf32>
    %cst_9 = arith.constant dense<0xFF800000> : vector<128xf32>
    %15 = vector.multi_reduction <maximumf>, %14, %cst_9 [1] : vector<128x64xf32> to vector<128xf32>
    %16 = vector.shape_cast %15 : vector<128xf32> to vector<128x1xf32>
    %17 = vector.broadcast %16 : vector<128x1xf32> to vector<128x64xf32>
    %18 = arith.subf %14, %17 : vector<128x64xf32>
    %19 = math.exp %18 : vector<128x64xf32>
    %cst_10 = arith.constant dense<0.000000e+00> : vector<128xf32>
    %20 = vector.multi_reduction <add>, %19, %cst_10 [1] : vector<128x64xf32> to vector<128xf32>
    %21 = vector.shape_cast %20 : vector<128xf32> to vector<128x1xf32>
    %c0_11 = arith.constant 0 : index
    %c0_12 = arith.constant 0 : index
    %22 = vector.load %arg11[%c0_11, %c0_12] : memref<64x2xf32, #tpu.memory_space<vmem>>, vector<64x2xf32>
    %cst_13 = arith.constant dense<0.000000e+00> : vector<128x2xf32>
    %23 = tpu.matmul %19, %22, %cst_13 {dimension_numbers = #tpu.dot_dimension_numbers<[1], [0], [0], [1], [0, 0, 1, 1], [], []>} : vector<128x64xf32>, vector<64x2xf32>, vector<128x2xf32> -> vector<128x2xf32>
    %24 = tpu.reciprocal %21 : vector<128x1xf32> -> vector<128x1xf32>
    %25 = vector.broadcast %24 : vector<128x1xf32> to vector<128x2xf32>
    %26 = arith.mulf %23, %25 : vector<128x2xf32>
    %c0_14 = arith.constant 0 : index
    %c0_15 = arith.constant 0 : index
    %27 = vector.load %arg7[%c0_14, %c0_15] : memref<2x4xf32, #tpu.memory_space<vmem>>, vector<2x4xf32>
    %cst_16 = arith.constant dense<0.000000e+00> : vector<128x4xf32>
    %28 = tpu.matmul %26, %27, %cst_16 {dimension_numbers = #tpu.dot_dimension_numbers<[1], [0], [0], [1], [0, 0, 1, 1], [], []>} : vector<128x2xf32>, vector<2x4xf32>, vector<128x4xf32> -> vector<128x4xf32>
    %c0_17 = arith.constant 0 : index
    %c0_18 = arith.constant 0 : index
    %29 = vector.load %arg8[%c0_17, %c0_18] : memref<1x4xf32, #tpu.memory_space<vmem>>, vector<1x4xf32>
    %30 = vector.broadcast %29 : vector<1x4xf32> to vector<128x4xf32>
    %31 = arith.addf %28, %30 : vector<128x4xf32>
    %32 = arith.addf %31, %7 : vector<128x4xf32>
    %c0_19 = arith.constant 0 : index
    %c0_20 = arith.constant 0 : index
    %c0_21 = arith.constant 0 : index
    %33 = vector.load %arg9[%c0_19, %c0_20, %c0_21] : memref<1x128x4xf32, #tpu.memory_space<vmem>>, vector<1x128x4xf32>
    %34 = vector.shape_cast %33 : vector<1x128x4xf32> to vector<128x4xf32>
    %35 = vector.shape_cast %32 : vector<128x4xf32> to vector<1x128x4xf32>
    tpu.vector_store %arg9[%c0_19, %c0_20, %c0_21], %35 {strides = array<i32>} : memref<1x128x4xf32, #tpu.memory_space<vmem>>, vector<1x128x4xf32>,
    return
  }
  func.func @transform_0(%arg0: i32, %arg1: i32) -> (i32, i32, i32) {
    %c0_i32 = arith.constant 0 : i32
    %c0_i32_0 = arith.constant 0 : i32
    %c0_i32_1 = arith.constant 0 : i32
    return %arg0, %c0_i32, %c0_i32_0 : i32, i32, i32
  }
  func.func @transform_1(%arg0: i32, %arg1: i32) -> (i32, i32) {
    %c0_i32 = arith.constant 0 : i32
    %c0_i32_0 = arith.constant 0 : i32
    %c0_i32_1 = arith.constant 0 : i32
    return %c0_i32, %c0_i32_0 : i32, i32
  }
  func.func @transform_2(%arg0: i32, %arg1: i32) -> (i32, i32) {
    %c0_i32 = arith.constant 0 : i32
    %c0_i32_0 = arith.constant 0 : i32
    %c0_i32_1 = arith.constant 0 : i32
    return %c0_i32, %c0_i32_0 : i32, i32
  }
  func.func @transform_3(%arg0: i32, %arg1: i32) -> (i32, i32) {
    %c0_i32 = arith.constant 0 : i32
    %c0_i32_0 = arith.constant 0 : i32
    %c0_i32_1 = arith.constant 0 : i32
    return %c0_i32, %c0_i32_0 : i32, i32
  }
  func.func @transform_4(%arg0: i32, %arg1: i32) -> (i32, i32) {
    %c0_i32 = arith.constant 0 : i32
    %c0_i32_0 = arith.constant 0 : i32
    %c0_i32_1 = arith.constant 0 : i32
    return %c0_i32, %c0_i32_0 : i32, i32
  }
  func.func @transform_5(%arg0: i32, %arg1: i32) -> (i32, i32) {
    %c0_i32 = arith.constant 0 : i32
    %c0_i32_0 = arith.constant 0 : i32
    %c0_i32_1 = arith.constant 0 : i32
    return %c0_i32, %c0_i32_0 : i32, i32
  }
  func.func @transform_6(%arg0: i32, %arg1: i32) -> (i32, i32) {
    %c0_i32 = arith.constant 0 : i32
    %c0_i32_0 = arith.constant 0 : i32
    %c0_i32_1 = arith.constant 0 : i32
    return %c0_i32, %c0_i32_0 : i32, i32
  }
  func.func @transform_7(%arg0: i32, %arg1: i32) -> (i32, i32, i32) {
    %c0_i32 = arith.constant 0 : i32
    %c0_i32_0 = arith.constant 0 : i32
    return %arg0, %arg1, %c0_i32 : i32, i32, i32
  }
}

</mosaic_0001>

<llo_original>
// kernel: tpu_custom_call.1
$region0: #{tpu_custom_call.1}
  #allocation0 [shape = 'u32[]', space=smem, size = 0x4, offset = 0x4, fixed_abs, tag = 'smem constant byte address 0x4 - core index']
  #allocation1 [shape = 'u32[144,128]{1,0:T(1,128)}', space=vmem, size = 0x12000, scoped, tag = 'internal scratch']
  #allocation2 [shape = 'f32[64,2]{1,0:T(8,128)}', space=vmem, size = 0x8000, scoped, tag = 'scratch operand']
  #allocation3 [shape = 'f32[64,2]{1,0:T(8,128)}', space=vmem, size = 0x8000, scoped, tag = 'scratch operand']
  %s0 = inlined_call_operand.vmem [shape: f32[2,256,4], index: 0, kind: input, shape index: {}]
  %s1 = inlined_call_operand.vmem [shape: f32[4,2], index: 1, kind: input, shape index: {}]
  %s2 = inlined_call_operand.vmem [shape: f32[1,2], index: 2, kind: input, shape index: {}]
  %s3 = inlined_call_operand.vmem [shape: f32[4,4], index: 3, kind: input, shape index: {}]
  %s4 = inlined_call_operand.vmem [shape: f32[1,4], index: 4, kind: input, shape index: {}]
  %s5 = inlined_call_operand.vmem [shape: f32[2,4], index: 5, kind: input, shape index: {}]
  %s6 = inlined_call_operand.vmem [shape: f32[1,4], index: 6, kind: input, shape index: {}]
  %s7 = inlined_call_operand.vmem [shape: f32[2,256,4], index: 7, kind: output, shape index: {}]
  %s8 = sld [smem:[#allocation0]]
  $region65: #{tpu_custom_call.1} parent=0
    _
  %s10 = ssub.s32 1, %s8
  %s11 = scalar_select 0, %s10, %s8
  loop: start=0, step=1, limit=6
  $region2: #{tpu_custom_call.1} parent=0 // loop_pre_header
    _
  $region3: #{tpu_custom_call.1} parent=0 // loop_header
    %s13 = sphi 0, %s17
    %p14 = scmp.ge.s32.totalorder %s13, 6
    %s20 = sphi 0, %s32
    %s21 = sphi 0, %s28
    %s22 = sphi 0, %s20
    %s23 = sphi 0, %s21
    %s24 = sphi 0, %s22
    %s25 = sphi 0, %s23
    %s35 = sphi 0, %s37
    %s38 = sphi 0, %s35
    %s39 = sphi 0, %s38
    %s55 = sphi 0, %s39
    %s59 = sphi 0, %s59
    %s61 = sphi 0, %s59
    %s62 = sphi 0, %s61
    %s76 = sphi 0, %s62
    %s80 = sphi 0, %s80
    %s82 = sphi 0, %s80
    %s83 = sphi 0, %s82
    %s97 = sphi 0, %s83
    %s101 = sphi 0, %s101
    %s103 = sphi 0, %s101
    %s104 = sphi 0, %s103
    %s118 = sphi 0, %s104
    %s122 = sphi 0, %s122
    %s124 = sphi 0, %s122
    %s125 = sphi 0, %s124
    %s139 = sphi 0, %s125
    %s143 = sphi 0, %s143
    %s145 = sphi 0, %s143
    %s146 = sphi 0, %s145
    %s160 = sphi 0, %s146
    %s164 = sphi 0, %s164
    %s166 = sphi 0, %s164
    %s167 = sphi 0, %s166
    %s181 = sphi 0, %s167
    %s189 = sphi 0, %s191
    %s192 = sphi 0, %s189
    %s193 = sphi 0, %s192
    %s209 = sphi 0, %s193
  $region4: #{tpu_custom_call.1} parent=0 // loop_header_branch
    %16 = sbr.rel (%p14) target = $region8
  $region5: #{tpu_custom_call.1} parent=0 // loop_body
    %s18 = ssub.s32 %s13, 1
    %s19 = ssub.s32 %s13, 2
    %s26 = sadd.s32 1, %s21
    %p27 = scmp.ge.s32.totalorder %s26, 2
    %s28 = scalar_select %p27, 0, %s26
    %s29 = sadd.s32 1, %s20
    %s30 = scalar_select %p27, %s29, %s20
    %p31 = scmp.ge.s32.totalorder %s30, 2
    %s32 = scalar_select %p31, 0, %s30
    %s33 = ssub.s32 %s20, %s32
    %p34 = scmp.eq.s32.totalorder %s33, 0
    %s36 = sadd.s32 %s35, 1
    %s37 = scalar_select %p34, %s35, %s36
    %p40 = pneg %p34
    %p41 = scmp.eq.s32.totalorder %s13, 3
    %p42 = por %p40, %p41
    %p43 = scmp.ne.s32.totalorder %s35, %s38
    %p44 = scmp.eq.s32.totalorder %s13, 0
    %p45 = por %p43, %p44
    %p46 = scmp.ne.s32.totalorder %s35, %s38
    %p47 = scmp.eq.s32.totalorder %s18, 3
    %p48 = por %p46, %p47
    %p49 = scmp.ne.s32.totalorder %s38, %s39
    %p50 = scmp.eq.s32.totalorder %s18, 0
    %p51 = por %p49, %p50
    %p52 = scmp.ne.s32.totalorder %s38, %s39
    %p53 = scmp.eq.s32.totalorder %s19, 3
    %p54 = por %p52, %p53
    %p56 = scmp.ne.s32.totalorder %s39, %s55
    %p57 = scmp.eq.s32.totalorder %s19, 0
    %p58 = por %p56, %p57
    %s60 = sadd.s32 %s59, 1
    %p63 = scmp.eq.s32.totalorder %s13, 3
    %p64 = scmp.ne.s32.totalorder %s59, %s61
    %p65 = scmp.eq.s32.totalorder %s13, 0
    %p66 = por %p64, %p65
    %p67 = scmp.ne.s32.totalorder %s59, %s61
    %p68 = scmp.eq.s32.totalorder %s18, 3
    %p69 = por %p67, %p68
    %p70 = scmp.ne.s32.totalorder %s61, %s62
    %p71 = scmp.eq.s32.totalorder %s18, 0
    %p72 = por %p70, %p71
    %p73 = scmp.ne.s32.totalorder %s61, %s62
    %p74 = scmp.eq.s32.totalorder %s19, 3
    %p75 = por %p73, %p74
    %p77 = scmp.ne.s32.totalorder %s62, %s76
    %p78 = scmp.eq.s32.totalorder %s19, 0
    %p79 = por %p77, %p78
    %s81 = sadd.s32 %s80, 1
    %p84 = scmp.eq.s32.totalorder %s13, 3
    %p85 = scmp.ne.s32.totalorder %s80, %s82
    %p86 = scmp.eq.s32.totalorder %s13, 0
    %p87 = por %p85, %p86
    %p88 = scmp.ne.s32.totalorder %s80, %s82
    %p89 = scmp.eq.s32.totalorder %s18, 3
    %p90 = por %p88, %p89
    %p91 = scmp.ne.s32.totalorder %s82, %s83
    %p92 = scmp.eq.s32.totalorder %s18, 0
    %p93 = por %p91, %p92
    %p94 = scmp.ne.s32.totalorder %s82, %s83
    %p95 = scmp.eq.s32.totalorder %s19, 3
    %p96 = por %p94, %p95
    %p98 = scmp.ne.s32.totalorder %s83, %s97
    %p99 = scmp.eq.s32.totalorder %s19, 0
    %p100 = por %p98, %p99
    %s102 = sadd.s32 %s101, 1
    %p105 = scmp.eq.s32.totalorder %s13, 3
    %p106 = scmp.ne.s32.totalorder %s101, %s103
    %p107 = scmp.eq.s32.totalorder %s13, 0
    %p108 = por %p106, %p107
    %p109 = scmp.ne.s32.totalorder %s101, %s103
    %p110 = scmp.eq.s32.totalorder %s18, 3
    %p111 = por %p109, %p110
    %p112 = scmp.ne.s32.totalorder %s103, %s104
    %p113 = scmp.eq.s32.totalorder %s18, 0
    %p114 = por %p112, %p113
    %p115 = scmp.ne.s32.totalorder %s103, %s104
    %p116 = scmp.eq.s32.totalorder %s19, 3
    %p117 = por %p115, %p116
    %p119 = scmp.ne.s32.totalorder %s104, %s118
    %p120 = scmp.eq.s32.totalorder %s19, 0
    %p121 = por %p119, %p120
    %s123 = sadd.s32 %s122, 1
    %p126 = scmp.eq.s32.totalorder %s13, 3
    %p127 = scmp.ne.s32.totalorder %s122, %s124
    %p128 = scmp.eq.s32.totalorder %s13, 0
    %p129 = por %p127, %p128
    %p130 = scmp.ne.s32.totalorder %s122, %s124
    %p131 = scmp.eq.s32.totalorder %s18, 3
    %p132 = por %p130, %p131
    %p133 = scmp.ne.s32.totalorder %s124, %s125
    %p134 = scmp.eq.s32.totalorder %s18, 0
    %p135 = por %p133, %p134
    %p136 = scmp.ne.s32.totalorder %s124, %s125
    %p137 = scmp.eq.s32.totalorder %s19, 3
    %p138 = por %p136, %p137
    %p140 = scmp.ne.s32.totalorder %s125, %s139
    %p141 = scmp.eq.s32.totalorder %s19, 0
    %p142 = por %p140, %p141
    %s144 = sadd.s32 %s143, 1
    %p147 = scmp.eq.s32.totalorder %s13, 3
    %p148 = scmp.ne.s32.totalorder %s143, %s145
    %p149 = scmp.eq.s32.totalorder %s13, 0
    %p150 = por %p148, %p149
    %p151 = scmp.ne.s32.totalorder %s143, %s145
    %p152 = scmp.eq.s32.totalorder %s18, 3
    %p153 = por %p151, %p152
    %p154 = scmp.ne.s32.totalorder %s145, %s146
    %p155 = scmp.eq.s32.totalorder %s18, 0
    %p156 = por %p154, %p155
    %p157 = scmp.ne.s32.totalorder %s145, %s146
    %p158 = scmp.eq.s32.totalorder %s19, 3
    %p159 = por %p157, %p158
    %p161 = scmp.ne.s32.totalorder %s146, %s160
    %p162 = scmp.eq.s32.totalorder %s19, 0
    %p163 = por %p161, %p162
    %s165 = sadd.s32 %s164, 1
    %p168 = scmp.eq.s32.totalorder %s13, 3
    %p169 = scmp.ne.s32.totalorder %s164, %s166
    %p170 = scmp.eq.s32.totalorder %s13, 0
    %p171 = por %p169, %p170
    %p172 = scmp.ne.s32.totalorder %s164, %s166
    %p173 = scmp.eq.s32.totalorder %s18, 3
    %p174 = por %p172, %p173
    %p175 = scmp.ne.s32.totalorder %s166, %s167
    %p176 = scmp.eq.s32.totalorder %s18, 0
    %p177 = por %p175, %p176
    %p178 = scmp.ne.s32.totalorder %s166, %s167
    %p179 = scmp.eq.s32.totalorder %s19, 3
    %p180 = por %p178, %p179
    %p182 = scmp.ne.s32.totalorder %s167, %s181
    %p183 = scmp.eq.s32.totalorder %s19, 0
    %p184 = por %p182, %p183
    %s185 = ssub.s32 %s20, %s32
    %s186 = ssub.s32 %s21, %s28
    %s187 = sor.u32 %s185, %s186
    %p188 = scmp.eq.s32.totalorder %s187, 0
    %s190 = sadd.s32 %s189, 1
    %s191 = scalar_select %p188, %s189, %s190
    %p194 = pneg %p188
    %p195 = scmp.eq.s32.totalorder %s13, 3
    %p196 = por %p194, %p195
    %p197 = scmp.ne.s32.totalorder %s189, %s192
    %p198 = scmp.eq.s32.totalorder %s13, 0
    %p199 = por %p197, %p198
    %p200 = scmp.ne.s32.totalorder %s189, %s192
    %p201 = scmp.eq.s32.totalorder %s18, 3
    %p202 = por %p200, %p201
    %p203 = scmp.ne.s32.totalorder %s192, %s193
    %p204 = scmp.eq.s32.totalorder %s18, 0
    %p205 = por %p203, %p204
    %p206 = scmp.ne.s32.totalorder %s192, %s193
    %p207 = scmp.eq.s32.totalorder %s19, 3
    %p208 = por %p206, %p207
    %p210 = scmp.ne.s32.totalorder %s193, %s209
    %p211 = scmp.eq.s32.totalorder %s19, 0
    %p212 = por %p210, %p211
    %p213 = scmp.le.s32.totalorder 1, %s13
    %p214 = scmp.lt.s32.totalorder %s13, 5
    %p215 = pnand %p213, %p214
    %p216 = pneg %p215
    // Predicated region
    $region9: #{tpu_custom_call.1} parent=5 // pred_check
      _
    $region10: #{tpu_custom_call.1} parent=5 // pred_check_branch
      %218 = sbr.rel (%p215) target = $region12
    $region11: #{tpu_custom_call.1} parent=5 // pred_region
      %s219 = ssub.s32 %s13, 1
      // Predicated region
      $region13: #{tpu_custom_call.1} parent=11 // pred_check
        %p220 = pneg %p72
      $region14: #{tpu_custom_call.1} parent=11 // pred_check_branch
        %222 = sbr.rel (%p220) target = $region16
      $region15: #{tpu_custom_call.1} parent=11 // pred_region
        _
      $region16: #{tpu_custom_call.1} parent=11 // pred_fallthru
        _
      // Predicated region
      $region17: #{tpu_custom_call.1} parent=11 // pred_check
        %p223 = pneg %p93
      $region18: #{tpu_custom_call.1} parent=11 // pred_check_branch
        %225 = sbr.rel (%p223) target = $region20
      $region19: #{tpu_custom_call.1} parent=11 // pred_region
        _
      $region20: #{tpu_custom_call.1} parent=11 // pred_fallthru
        _
      // Predicated region
      $region21: #{tpu_custom_call.1} parent=11 // pred_check
        %p226 = pneg %p114
      $region22: #{tpu_custom_call.1} parent=11 // pred_check_branch
        %228 = sbr.rel (%p226) target = $region24
      $region23: #{tpu_custom_call.1} parent=11 // pred_region
        _
      $region24: #{tpu_custom_call.1} parent=11 // pred_fallthru
        _
      // Predicated region
      $region25: #{tpu_custom_call.1} parent=11 // pred_check
        %p229 = pneg %p135
      $region26: #{tpu_custom_call.1} parent=11 // pred_check_branch
        %231 = sbr.rel (%p229) target = $region28
      $region27: #{tpu_custom_call.1} parent=11 // pred_region
        _
      $region28: #{tpu_custom_call.1} parent=11 // pred_fallthru
        _
      // Predicated region
      $region29: #{tpu_custom_call.1} parent=11 // pred_check
        %p232 = pneg %p156
      $region30: #{tpu_custom_call.1} parent=11 // pred_check_branch
        %234 = sbr.rel (%p232) target = $region32
      $region31: #{tpu_custom_call.1} parent=11 // pred_region
        _
      $region32: #{tpu_custom_call.1} parent=11 // pred_fallthru
        _
      // Predicated region
      $region33: #{tpu_custom_call.1} parent=11 // pred_check
        %p235 = pneg %p177
      $region34: #{tpu_custom_call.1} parent=11 // pred_check_branch
        %237 = sbr.rel (%p235) target = $region36
      $region35: #{tpu_custom_call.1} parent=11 // pred_region
        _
      $region36: #{tpu_custom_call.1} parent=11 // pred_fallthru
        _
    $region12: #{tpu_custom_call.1} parent=5 // pred_fallthru
      _
    %p238 = scmp.lt.s32.totalorder %s13, 4
    // Predicated region
    $region37: #{tpu_custom_call.1} parent=5 // pred_check
      %p239 = pneg %p238
    $region38: #{tpu_custom_call.1} parent=5 // pred_check_branch
      %241 = sbr.rel (%p239) target = $region40
    $region39: #{tpu_custom_call.1} parent=5 // pred_region
      // Predicated region
      $region41: #{tpu_custom_call.1} parent=39 // pred_check
        %p242 = pneg %p45
      $region42: #{tpu_custom_call.1} parent=39 // pred_check_branch
        %244 = sbr.rel (%p242) target = $region44
      $region43: #{tpu_custom_call.1} parent=39 // pred_region
        %p245 = scmp.lt.s32.totalorder %s20, 1
        %s246 = scalar_select %p245, %s20, 1
        %s247 = smul.addr %s246, 32
        %s248 = smul.addr %s247, 8
        %s249 = scalar_lea.vmem %s0, %s248
      $region44: #{tpu_custom_call.1} parent=39 // pred_fallthru
        _
    $region40: #{tpu_custom_call.1} parent=5 // pred_fallthru
      _
    %p250 = scmp.le.s32.totalorder 1, %s13
    %p251 = scmp.lt.s32.totalorder %s13, 5
    %p252 = pnand %p250, %p251
    %p253 = pneg %p252
    // Predicated region
    $region45: #{tpu_custom_call.1} parent=5 // pred_check
      _
    $region46: #{tpu_custom_call.1} parent=5 // pred_check_branch
      %255 = sbr.rel (%p252) target = $region48
    $region47: #{tpu_custom_call.1} parent=5 // pred_region
      %s256 = ssub.s32 %s13, 1
      %p257 = scmp.lt.s32.totalorder %s22, 1
      %s258 = scalar_select %p257, %s22, 1
      %s259 = smul.addr %s258, 32
      %s260 = smul.addr %s259, 8
      %s261 = scalar_lea.vmem %s0, %s260
      %p262 = pneg %p51
      %p263 = pneg %p48
      %p264 = pneg %p72
      %p265 = pneg %p69
      %p266 = pneg %p93
      %p267 = pneg %p90
      %p268 = pneg %p114
      %p269 = pneg %p111
      %p270 = pneg %p135
      %p271 = pneg %p132
      %p272 = pneg %p156
      %p273 = pneg %p153
      %p274 = pneg %p177
      %p275 = pneg %p174
      %p276 = pneg %p205
      %p277 = pneg %p202
      %s278 = smul.u32 16, %s23
      %p279 = scmp.lt.s32.totalorder %s22, 1
      %s280 = scalar_select %p279, %s22, 1
      %p281 = scmp.lt.s32.totalorder %s278, 31
      %s282 = scalar_select %p281, %s278, 31
      %s283 = smul.addr %s280, 32
      %s284 = sadd.s32 %s282, %s283
      %s285 = smul.addr %s284, 8
      %s286 = scalar_lea.vmem %s7, %s285
      %p287 = scmp.lt.s32.totalorder %s22, 1
      %s288 = scalar_select %p287, %s22, 1
      %s289 = smul.addr %s288, 32
      %s290 = smul.addr %s289, 8
      %s291 = scalar_lea.vmem %s0, %s290
      %s292 = smul.u32 16, %s23
      %p293 = scmp.lt.s32.totalorder %s22, 1
      %s294 = scalar_select %p293, %s22, 1
      %p295 = scmp.lt.s32.totalorder %s292, 31
      %s296 = scalar_select %p295, %s292, 31
      %s297 = smul.addr %s294, 32
      %s298 = sadd.s32 %s296, %s297
      %s299 = smul.addr %s298, 8
      %s300 = scalar_lea.vmem %s7, %s299
      %s301 = smul.u32 16, %s23
      %p302 = scmp.eq.s32.totalorder %s23, 0
      // Predicated region
      $region49: #{tpu_custom_call.1} parent=47 // pred_check
        %p303 = pneg %p302
      $region50: #{tpu_custom_call.1} parent=47 // pred_check_branch
        %305 = sbr.rel (%p303) target = $region52
      $region51: #{tpu_custom_call.1} parent=47 // pred_region
        %v306 = vld [vmem:[%s291] sm:$0xff]
        %v307 = vld [vmem:[%s291 + $0x8] sm:$0xff]
        %v308 = vld [vmem:[%s291 + $0x10] sm:$0xff]
        %v309 = vld [vmem:[%s291 + $0x18] sm:$0xff]
        %v310 = vld [vmem:[%s291 + $0x20] sm:$0xff]
        %v311 = vld [vmem:[%s291 + $0x28] sm:$0xff]
        %v312 = vld [vmem:[%s291 + $0x30] sm:$0xff]
        %v313 = vld [vmem:[%s291 + $0x38] sm:$0xff]
        %v314 = vld [vmem:[%s291 + $0x40] sm:$0xff]
        %v315 = vld [vmem:[%s291 + $0x48] sm:$0xff]
        %v316 = vld [vmem:[%s291 + $0x50] sm:$0xff]
        %v317 = vld [vmem:[%s291 + $0x58] sm:$0xff]
        %v318 = vld [vmem:[%s291 + $0x60] sm:$0xff]
        %v319 = vld [vmem:[%s291 + $0x68] sm:$0xff]
        %v320 = vld [vmem:[%s291 + $0x70] sm:$0xff]
        %v321 = vld [vmem:[%s291 + $0x78] sm:$0xff]
        %v322 = vld [vmem:[%s291 + $0x80] sm:$0xff]
        %v323 = vld [vmem:[%s291 + $0x88] sm:$0xff]
        %v324 = vld [vmem:[%s291 + $0x90] sm:$0xff]
        %v325 = vld [vmem:[%s291 + $0x98] sm:$0xff]
        %v326 = vld [vmem:[%s291 + $0xa0] sm:$0xff]
        %v327 = vld [vmem:[%s291 + $0xa8] sm:$0xff]
        %v328 = vld [vmem:[%s291 + $0xb0] sm:$0xff]
        %v329 = vld [vmem:[%s291 + $0xb8] sm:$0xff]
        %v330 = vld [vmem:[%s291 + $0xc0] sm:$0xff]
        %v331 = vld [vmem:[%s291 + $0xc8] sm:$0xff]
        %v332 = vld [vmem:[%s291 + $0xd0] sm:$0xff]
        %v333 = vld [vmem:[%s291 + $0xd8] sm:$0xff]
        %v334 = vld [vmem:[%s291 + $0xe0] sm:$0xff]
        %v335 = vld [vmem:[%s291 + $0xe8] sm:$0xff]
        %v336 = vld [vmem:[%s291 + $0xf0] sm:$0xff]
        %v337 = vld [vmem:[%s291 + $0xf8] sm:$0xff]
        %v338 = vld [vmem:[%s3] sm:$0xf]
        %vm339 = vcmask 31744
        %v341 = vsel %vm339, %v306, 0
        %v344 = vsel %vm339, %v307, 0
        %v347 = vsel %vm339, %v308, 0
        %v350 = vsel %vm339, %v309, 0
        %v353 = vsel %vm339, %v310, 0
        %v356 = vsel %vm339, %v311, 0
        %v359 = vsel %vm339, %v312, 0
        %v362 = vsel %vm339, %v313, 0
        %v365 = vsel %vm339, %v314, 0
        %v368 = vsel %vm339, %v315, 0
        %v371 = vsel %vm339, %v316, 0
        %v374 = vsel %vm339, %v317, 0
        %v377 = vsel %vm339, %v318, 0
        %v380 = vsel %vm339, %v319, 0
        %v383 = vsel %vm339, %v320, 0
        %v386 = vsel %vm339, %v321, 0
        %v389 = vsel %vm339, %v322, 0
        %v392 = vsel %vm339, %v323, 0
        %v395 = vsel %vm339, %v324, 0
        %v398 = vsel %vm339, %v325, 0
        %v401 = vsel %vm339, %v326, 0
        %v404 = vsel %vm339, %v327, 0
        %v407 = vsel %vm339, %v328, 0
        %v410 = vsel %vm339, %v329, 0
        %v413 = vsel %vm339, %v330, 0
        %v416 = vsel %vm339, %v331, 0
        %v419 = vsel %vm339, %v332, 0
        %v422 = vsel %vm339, %v333, 0
        %v425 = vsel %vm339, %v334, 0
        %v428 = vsel %vm339, %v335, 0
        %v431 = vsel %vm339, %v336, 0
        %v434 = vsel %vm339, %v337, 0
        %vm436 = vcmask 1043456
        %v438 = vsel %vm436, %v338, 0
        %440 = vmatprep.subr.mxu0 0.0
        %441 = vmatpush1.msra.mxu0 %v438
        %442 = vmatprep.subr.mxu0 0.0
        %443 = vmatpush1.msra.mxu0 0.0
        %444 = vmatprep.subr.mxu0 0.0
        %445 = vmatpush1.msra.mxu0 0.0
        %446 = vmatprep.subr.mxu0 0.0
        %447 = vmatpush1.msra.mxu0 0.0
        %448 = vmatprep.subr.mxu0 0.0
        %449 = vmatpush1.msra.mxu0 0.0
        %450 = vmatprep.subr.mxu0 0.0
        %451 = vmatpush1.msra.mxu0 0.0
        %452 = vmatprep.subr.mxu0 0.0
        %453 = vmatpush1.msra.mxu0 0.0
        %454 = vmatprep.subr.mxu0 0.0
        %455 = vmatpush1.msra.mxu0 0.0
        %456 = vmatprep.subr.mxu0 0.0
        %457 = vmatpush1.msra.mxu0 0.0
        %458 = vmatprep.subr.mxu0 0.0
        %459 = vmatpush1.msra.mxu0 0.0
        %460 = vmatprep.subr.mxu0 0.0
        %461 = vmatpush1.msra.mxu0 0.0
        %462 = vmatprep.subr.mxu0 0.0
        %463 = vmatpush1.msra.mxu0 0.0
        %464 = vmatprep.subr.mxu0 0.0
        %465 = vmatpush1.msra.mxu0 0.0
        %466 = vmatprep.subr.mxu0 0.0
        %467 = vmatpush1.msra.mxu0 0.0
        %468 = vmatprep.subr.mxu0 0.0
        %469 = vmatpush1.msra.mxu0 0.0
        %470 = vmatprep.subr.mxu0 0.0
        %471 = vmatpush1.msra.mxu0 0.0
        %472 = vmatprep.subr.mxu0 0.0
        %473 = vmatpush1.msra.mxu0 0.0
        %474 = vmatprep.subr.mxu0 0.0
        %475 = vmatpush1.msra.mxu0 0.0
        %476 = vmatprep.subr.mxu0 0.0
        %477 = vmatpush1.msra.mxu0 0.0
        %478 = vmatprep.subr.mxu0 0.0
        %479 = vmatpush1.msra.mxu0 0.0
        %480 = vmatprep.subr.mxu0 0.0
        %481 = vmatpush1.msra.mxu0 0.0
        %482 = vmatprep.subr.mxu0 0.0
        %483 = vmatpush1.msra.mxu0 0.0
        %484 = vmatprep.subr.mxu0 0.0
        %485 = vmatpush1.msra.mxu0 0.0
        %486 = vmatprep.subr.mxu0 0.0
        %487 = vmatpush1.msra.mxu0 0.0
        %488 = vmatprep.subr.mxu0 0.0
        %489 = vmatpush1.msra.mxu0 0.0
        %490 = vmatprep.subr.mxu0 0.0
        %491 = vmatpush1.msra.mxu0 0.0
        %492 = vmatprep.subr.mxu0 0.0
        %493 = vmatpush1.msra.mxu0 0.0
        %494 = vmatprep.subr.mxu0 0.0
        %495 = vmatpush1.msra.mxu0 0.0
        %496 = vmatprep.subr.mxu0 0.0
        %497 = vmatpush1.msra.mxu0 0.0
        %498 = vmatprep.subr.mxu0 0.0
        %499 = vmatpush1.msra.mxu0 0.0
        %500 = vmatprep.subr.mxu0 0.0
        %501 = vmatpush1.msra.mxu0 0.0
        %502 = vmatprep.subr.mxu0 0.0
        %503 = vmatpush1.msra.mxu0 0.0
        %504 = vmatprep.mubr.f32.mxu0 0.0
        %505 = vmatmul.mubr.f32.gmra.mrb[0].mxu0 %v341
        %v506 = vpop.f32.mrb[0].mxu0
        %v507 = vadd.f32 0.0, %v506
        %v508 = vpop.f32.mrb[0].mxu0
        %509 = vmatprep.mubr.f32.mxu0 0.0
        %510 = vmatmul.mubr.f32.gmra.mrb[0].mxu0 %v344
        %v511 = vpop.f32.mrb[0].mxu0
        %v512 = vadd.f32 0.0, %v511
        %v513 = vpop.f32.mrb[0].mxu0
        %514 = vmatprep.mubr.f32.mxu0 0.0
        %515 = vmatmul.mubr.f32.gmra.mrb[0].mxu0 %v347
        %v516 = vpop.f32.mrb[0].mxu0
        %v517 = vadd.f32 0.0, %v516
        %v518 = vpop.f32.mrb[0].mxu0
        %519 = vmatprep.mubr.f32.mxu0 0.0
        %520 = vmatmul.mubr.f32.gmra.mrb[0].mxu0 %v350
        %v521 = vpop.f32.mrb[0].mxu0
        %v522 = vadd.f32 0.0, %v521
        %v523 = vpop.f32.mrb[0].mxu0
        %524 = vmatprep.mubr.f32.mxu0 0.0
        %525 = vmatmul.mubr.f32.gmra.mrb[0].mxu0 %v353
        %v526 = vpop.f32.mrb[0].mxu0
        %v527 = vadd.f32 0.0, %v526
        %v528 = vpop.f32.mrb[0].mxu0
        %529 = vmatprep.mubr.f32.mxu0 0.0
        %530 = vmatmul.mubr.f32.gmra.mrb[0].mxu0 %v356
        %v531 = vpop.f32.mrb[0].mxu0
        %v532 = vadd.f32 0.0, %v531
        %v533 = vpop.f32.mrb[0].mxu0
        %534 = vmatprep.mubr.f32.mxu0 0.0
        %535 = vmatmul.mubr.f32.gmra.mrb[0].mxu0 %v359
        %v536 = vpop.f32.mrb[0].mxu0
        %v537 = vadd.f32 0.0, %v536
        %v538 = vpop.f32.mrb[0].mxu0
        %539 = vmatprep.mubr.f32.mxu0 0.0
        %540 = vmatmul.mubr.f32.gmra.mrb[0].mxu0 %v362
        %v541 = vpop.f32.mrb[0].mxu0
        %v542 = vadd.f32 0.0, %v541
        %v543 = vpop.f32.mrb[0].mxu0
        %544 = vmatprep.mubr.f32.mxu0 0.0
        %545 = vmatmul.mubr.f32.gmra.mrb[0].mxu0 %v365
        %v546 = vpop.f32.mrb[0].mxu0
        %v547 = vadd.f32 0.0, %v546
        %v548 = vpop.f32.mrb[0].mxu0
        %549 = vmatprep.mubr.f32.mxu0 0.0
        %550 = vmatmul.mubr.f32.gmra.mrb[0].mxu0 %v368
        %v551 = vpop.f32.mrb[0].mxu0
        %v552 = vadd.f32 0.0, %v551
        %v553 = vpop.f32.mrb[0].mxu0
        %554 = vmatprep.mubr.f32.mxu0 0.0
        %555 = vmatmul.mubr.f32.gmra.mrb[0].mxu0 %v371
        %v556 = vpop.f32.mrb[0].mxu0
        %v557 = vadd.f32 0.0, %v556
        %v558 = vpop.f32.mrb[0].mxu0
        %559 = vmatprep.mubr.f32.mxu0 0.0
        %560 = vmatmul.mubr.f32.gmra.mrb[0].mxu0 %v374
        %v561 = vpop.f32.mrb[0].mxu0
        %v562 = vadd.f32 0.0, %v561
        %v563 = vpop.f32.mrb[0].mxu0
        %564 = vmatprep.mubr.f32.mxu0 0.0
        %565 = vmatmul.mubr.f32.gmra.mrb[0].mxu0 %v377
        %v566 = vpop.f32.mrb[0].mxu0
        %v567 = vadd.f32 0.0, %v566
        %v568 = vpop.f32.mrb[0].mxu0
        %569 = vmatprep.mubr.f32.mxu0 0.0
        %570 = vmatmul.mubr.f32.gmra.mrb[0].mxu0 %v380
        %v571 = vpop.f32.mrb[0].mxu0
        %v572 = vadd.f32 0.0, %v571
        %v573 = vpop.f32.mrb[0].mxu0
        %574 = vmatprep.mubr.f32.mxu0 0.0
        %575 = vmatmul.mubr.f32.gmra.mrb[0].mxu0 %v383
        %v576 = vpop.f32.mrb[0].mxu0
        %v577 = vadd.f32 0.0, %v576
        %v578 = vpop.f32.mrb[0].mxu0
        %579 = vmatprep.mubr.f32.mxu0 0.0
        %580 = vmatmul.mubr.f32.gmra.mrb[0].mxu0 %v386
        %v581 = vpop.f32.mrb[0].mxu0
        %v582 = vadd.f32 0.0, %v581
        %v583 = vpop.f32.mrb[0].mxu0
        %584 = vmatprep.mubr.f32.mxu0 0.0
        %585 = vmatmul.mubr.f32.gmra.mrb[0].mxu0 %v389
        %v586 = vpop.f32.mrb[0].mxu0
        %v587 = vadd.f32 0.0, %v586
        %v588 = vpop.f32.mrb[0].mxu0
        %589 = vmatprep.mubr.f32.mxu0 0.0
        %590 = vmatmul.mubr.f32.gmra.mrb[0].mxu0 %v392
        %v591 = vpop.f32.mrb[0].mxu0
        %v592 = vadd.f32 0.0, %v591
        %v593 = vpop.f32.mrb[0].mxu0
        %594 = vmatprep.mubr.f32.mxu0 0.0
        %595 = vmatmul.mubr.f32.gmra.mrb[0].mxu0 %v395
        %v596 = vpop.f32.mrb[0].mxu0
        %v597 = vadd.f32 0.0, %v596
        %v598 = vpop.f32.mrb[0].mxu0
        %599 = vmatprep.mubr.f32.mxu0 0.0
        %600 = vmatmul.mubr.f32.gmra.mrb[0].mxu0 %v398
        %v601 = vpop.f32.mrb[0].mxu0
        %v602 = vadd.f32 0.0, %v601
        %v603 = vpop.f32.mrb[0].mxu0
        %604 = vmatprep.mubr.f32.mxu0 0.0
        %605 = vmatmul.mubr.f32.gmra.mrb[0].mxu0 %v401
        %v606 = vpop.f32.mrb[0].mxu0
        %v607 = vadd.f32 0.0, %v606
        %v608 = vpop.f32.mrb[0].mxu0
        %609 = vmatprep.mubr.f32.mxu0 0.0
        %610 = vmatmul.mubr.f32.gmra.mrb[0].mxu0 %v404
        %v611 = vpop.f32.mrb[0].mxu0
        %v612 = vadd.f32 0.0, %v611
        %v613 = vpop.f32.mrb[0].mxu0
        %614 = vmatprep.mubr.f32.mxu0 0.0
        %615 = vmatmul.mubr.f32.gmra.mrb[0].mxu0 %v407
        %v616 = vpop.f32.mrb[0].mxu0
        %v617 = vadd.f32 0.0, %v616
        %v618 = vpop.f32.mrb[0].mxu0
        %619 = vmatprep.mubr.f32.mxu0 0.0
        %620 = vmatmul.mubr.f32.gmra.mrb[0].mxu0 %v410
        %v621 = vpop.f32.mrb[0].mxu0
        %v622 = vadd.f32 0.0, %v621
        %v623 = vpop.f32.mrb[0].mxu0
        %624 = vmatprep.mubr.f32.mxu0 0.0
        %625 = vmatmul.mubr.f32.gmra.mrb[0].mxu0 %v413
        %v626 = vpop.f32.mrb[0].mxu0
        %v627 = vadd.f32 0.0, %v626
        %v628 = vpop.f32.mrb[0].mxu0
        %629 = vmatprep.mubr.f32.mxu0 0.0
        %630 = vmatmul.mubr.f32.gmra.mrb[0].mxu0 %v416
        %v631 = vpop.f32.mrb[0].mxu0
        %v632 = vadd.f32 0.0, %v631
        %v633 = vpop.f32.mrb[0].mxu0
        %634 = vmatprep.mubr.f32.mxu0 0.0
        %635 = vmatmul.mubr.f32.gmra.mrb[0].mxu0 %v419
        %v636 = vpop.f32.mrb[0].mxu0
        %v637 = vadd.f32 0.0, %v636
        %v638 = vpop.f32.mrb[0].mxu0
        %639 = vmatprep.mubr.f32.mxu0 0.0
        %640 = vmatmul.mubr.f32.gmra.mrb[0].mxu0 %v422
        %v641 = vpop.f32.mrb[0].mxu0
        %v642 = vadd.f32 0.0, %v641
        %v643 = vpop.f32.mrb[0].mxu0
        %644 = vmatprep.mubr.f32.mxu0 0.0
        %645 = vmatmul.mubr.f32.gmra.mrb[0].mxu0 %v425
        %v646 = vpop.f32.mrb[0].mxu0
        %v647 = vadd.f32 0.0, %v646
        %v648 = vpop.f32.mrb[0].mxu0
        %649 = vmatprep.mubr.f32.mxu0 0.0
        %650 = vmatmul.mubr.f32.gmra.mrb[0].mxu0 %v428
        %v651 = vpop.f32.mrb[0].mxu0
        %v652 = vadd.f32 0.0, %v651
        %v653 = vpop.f32.mrb[0].mxu0
        %654 = vmatprep.mubr.f32.mxu0 0.0
        %655 = vmatmul.mubr.f32.gmra.mrb[0].mxu0 %v431
        %v656 = vpop.f32.mrb[0].mxu0
        %v657 = vadd.f32 0.0, %v656
        %v658 = vpop.f32.mrb[0].mxu0
        %659 = vmatprep.mubr.f32.mxu0 0.0
        %660 = vmatmul.mubr.f32.gmra.mrb[0].mxu0 %v434
        %v661 = vpop.f32.mrb[0].mxu0
        %v662 = vadd.f32 0.0, %v661
        %v663 = vpop.f32.mrb[0].mxu0
        %664 = vdwg.mxu0
        %v665 = vmax.f32 %v507, %v547
        %v666 = vmax.f32 %v512, %v552
        %v667 = vmax.f32 %v517, %v557
        %v668 = vmax.f32 %v522, %v562
        %v669 = vmax.f32 %v527, %v567
        %v670 = vmax.f32 %v532, %v572
        %v671 = vmax.f32 %v537, %v577
        %v672 = vmax.f32 %v542, %v582
        %v673 = vmax.f32 %v587, %v627
        %v674 = vmax.f32 %v592, %v632
        %v675 = vmax.f32 %v597, %v637
        %v676 = vmax.f32 %v602, %v642
        %v677 = vmax.f32 %v607, %v647
        %v678 = vmax.f32 %v612, %v652
        %v679 = vmax.f32 %v617, %v657
        %v680 = vmax.f32 %v622, %v662
        %v681 = vmax.f32 %v665, %v673
        %v682 = vmax.f32 %v666, %v674
        %v683 = vmax.f32 %v667, %v675
        %v684 = vmax.f32 %v668, %v676
        %v685 = vmax.f32 %v669, %v677
        %v686 = vmax.f32 %v670, %v678
        %v687 = vmax.f32 %v671, %v679
        %v688 = vmax.f32 %v672, %v680
        %v689 = vld [vmem:[%s4] sm:$0x1]
        %v691 = vlaneseq
        %v692 = vshrl.u32 %v691, 7
        %v693 = vsub.s32 0, %v692
        %v694 = vrot.slane %v689, %v693
        %v696 = vadd.f32 %v681, %v694
        %v697 = vadd.f32 %v682, %v694
        %v698 = vadd.f32 %v683, %v694
        %v699 = vadd.f32 %v684, %v694
        %v700 = vadd.f32 %v685, %v694
        %v701 = vadd.f32 %v686, %v694
        %v702 = vadd.f32 %v687, %v694
        %v703 = vadd.f32 %v688, %v694
        %vm704 = vcmask 15360
        %705 = vst.msk [vmem:[#allocation2] sm:$0xff] %vm704, %v696
        %706 = vst.msk [vmem:[#allocation2 + $0x8] sm:$0xff] %vm704, %v697
        %707 = vst.msk [vmem:[#allocation2 + $0x10] sm:$0xff] %vm704, %v698
        %708 = vst.msk [vmem:[#allocation2 + $0x18] sm:$0xff] %vm704, %v699
        %709 = vst.msk [vmem:[#allocation2 + $0x20] sm:$0xff] %vm704, %v700
        %710 = vst.msk [vmem:[#allocation2 + $0x28] sm:$0xff] %vm704, %v701
        %711 = vst.msk [vmem:[#allocation2 + $0x30] sm:$0xff] %vm704, %v702
        %712 = vst.msk [vmem:[#allocation2 + $0x38] sm:$0xff] %vm704, %v703
        %721 = vrot.lane.b32.xlu0 %v696, 126
        %v722 = vpop.permute.xlu0 %721
        %723 = vrot.lane.b32.xlu0 %v697, 126
        %v724 = vpop.permute.xlu0 %723
        %725 = vrot.lane.b32.xlu0 %v698, 126
        %v726 = vpop.permute.xlu0 %725
        %727 = vrot.lane.b32.xlu0 %v699, 126
        %v728 = vpop.permute.xlu0 %727
        %729 = vrot.lane.b32.xlu0 %v700, 126
        %v730 = vpop.permute.xlu0 %729
        %731 = vrot.lane.b32.xlu0 %v701, 126
        %v732 = vpop.permute.xlu0 %731
        %733 = vrot.lane.b32.xlu0 %v702, 126
        %v734 = vpop.permute.xlu0 %733
        %735 = vrot.lane.b32.xlu0 %v703, 126
        %v736 = vpop.permute.xlu0 %735
        %745 = vst.msk [vmem:[#allocation3] sm:$0xff] %vm704, %v722
        %746 = vst.msk [vmem:[#allocation3 + $0x8] sm:$0xff] %vm704, %v724
        %747 = vst.msk [vmem:[#allocation3 + $0x10] sm:$0xff] %vm704, %v726
        %748 = vst.msk [vmem:[#allocation3 + $0x18] sm:$0xff] %vm704, %v728
        %749 = vst.msk [vmem:[#allocation3 + $0x20] sm:$0xff] %vm704, %v730
        %750 = vst.msk [vmem:[#allocation3 + $0x28] sm:$0xff] %vm704, %v732
        %751 = vst.msk [vmem:[#allocation3 + $0x30] sm:$0xff] %vm704, %v734
        %752 = vst.msk [vmem:[#allocation3 + $0x38] sm:$0xff] %vm704, %v736
      $region52: #{tpu_custom_call.1} parent=47 // pred_fallthru
        _
      %s753 = smul.u32 %s23, 128
      %s754 = scalar_lea.vmem %s291, %s753
      %v755 = vld [vmem:[%s754] sm:$0xff]
      %v756 = vld [vmem:[%s754 + $0x8] sm:$0xff]
      %v757 = vld [vmem:[%s754 + $0x10] sm:$0xff]
      %v758 = vld [vmem:[%s754 + $0x18] sm:$0xff]
      %v759 = vld [vmem:[%s754 + $0x20] sm:$0xff]
      %v760 = vld [vmem:[%s754 + $0x28] sm:$0xff]
      %v761 = vld [vmem:[%s754 + $0x30] sm:$0xff]
      %v762 = vld [vmem:[%s754 + $0x38] sm:$0xff]
      %v763 = vld [vmem:[%s754 + $0x40] sm:$0xff]
      %v764 = vld [vmem:[%s754 + $0x48] sm:$0xff]
      %v765 = vld [vmem:[%s754 + $0x50] sm:$0xff]
      %v766 = vld [vmem:[%s754 + $0x58] sm:$0xff]
      %v767 = vld [vmem:[%s754 + $0x60] sm:$0xff]
      %v768 = vld [vmem:[%s754 + $0x68] sm:$0xff]
      %v769 = vld [vmem:[%s754 + $0x70] sm:$0xff]
      %v770 = vld [vmem:[%s754 + $0x78] sm:$0xff]
      %v771 = vld [vmem:[%s1] sm:$0xf]
      %v772 = vld [vmem:[%s2] sm:$0x1]
      %v774 = vlaneseq
      %v775 = vshrl.u32 %v774, 7
      %v776 = vsub.s32 0, %v775
      %v777 = vrot.slane %v772, %v776
      %vm779 = vcmask 31744
      %v781 = vsel %vm779, %v755, 0
      %v784 = vsel %vm779, %v756, 0
      %v787 = vsel %vm779, %v757, 0
      %v790 = vsel %vm779, %v758, 0
      %v793 = vsel %vm779, %v759, 0
      %v796 = vsel %vm779, %v760, 0
      %v799 = vsel %vm779, %v761, 0
      %v802 = vsel %vm779, %v762, 0
      %v805 = vsel %vm779, %v763, 0
      %v808 = vsel %vm779, %v764, 0
      %v811 = vsel %vm779, %v765, 0
      %v814 = vsel %vm779, %v766, 0
      %v817 = vsel %vm779, %v767, 0
      %v820 = vsel %vm779, %v768, 0
      %v823 = vsel %vm779, %v769, 0
      %v826 = vsel %vm779, %v770, 0
      %vm828 = vcmask 1043456
      %v830 = vsel %vm828, %v771, 0
      %832 = vmatprep.subr.mxu0 0.0
      %833 = vmatpush1.msra.mxu0 %v830
      %834 = vmatprep.subr.mxu0 0.0
      %835 = vmatpush1.msra.mxu0 0.0
      %836 = vmatprep.subr.mxu0 0.0
      %837 = vmatpush1.msra.mxu0 0.0
      %838 = vmatprep.subr.mxu0 0.0
      %839 = vmatpush1.msra.mxu0 0.0
      %840 = vmatprep.subr.mxu0 0.0
      %841 = vmatpush1.msra.mxu0 0.0
      %842 = vmatprep.subr.mxu0 0.0
      %843 = vmatpush1.msra.mxu0 0.0
      %844 = vmatprep.subr.mxu0 0.0
      %845 = vmatpush1.msra.mxu0 0.0
      %846 = vmatprep.subr.mxu0 0.0
      %847 = vmatpush1.msra.mxu0 0.0
      %848 = vmatprep.subr.mxu0 0.0
      %849 = vmatpush1.msra.mxu0 0.0
      %850 = vmatprep.subr.mxu0 0.0
      %851 = vmatpush1.msra.mxu0 0.0
      %852 = vmatprep.subr.mxu0 0.0
      %853 = vmatpush1.msra.mxu0 0.0
      %854 = vmatprep.subr.mxu0 0.0
      %855 = vmatpush1.msra.mxu0 0.0
      %856 = vmatprep.subr.mxu0 0.0
      %857 = vmatpush1.msra.mxu0 0.0
      %858 = vmatprep.subr.mxu0 0.0
      %859 = vmatpush1.msra.mxu0 0.0
      %860 = vmatprep.subr.mxu0 0.0
      %861 = vmatpush1.msra.mxu0 0.0
      %862 = vmatprep.subr.mxu0 0.0
      %863 = vmatpush1.msra.mxu0 0.0
      %864 = vmatprep.subr.mxu0 0.0
      %865 = vmatpush1.msra.mxu0 0.0
      %866 = vmatprep.subr.mxu0 0.0
      %867 = vmatpush1.msra.mxu0 0.0
      %868 = vmatprep.subr.mxu0 0.0
      %869 = vmatpush1.msra.mxu0 0.0
      %870 = vmatprep.subr.mxu0 0.0
      %871 = vmatpush1.msra.mxu0 0.0
      %872 = vmatprep.subr.mxu0 0.0
      %873 = vmatpush1.msra.mxu0 0.0
      %874 = vmatprep.subr.mxu0 0.0
      %875 = vmatpush1.msra.mxu0 0.0
      %876 = vmatprep.subr.mxu0 0.0
      %877 = vmatpush1.msra.mxu0 0.0
      %878 = vmatprep.subr.mxu0 0.0
      %879 = vmatpush1.msra.mxu0 0.0
      %880 = vmatprep.subr.mxu0 0.0
      %881 = vmatpush1.msra.mxu0 0.0
      %882 = vmatprep.subr.mxu0 0.0
      %883 = vmatpush1.msra.mxu0 0.0
      %884 = vmatprep.subr.mxu0 0.0
      %885 = vmatpush1.msra.mxu0 0.0
      %886 = vmatprep.subr.mxu0 0.0
      %887 = vmatpush1.msra.mxu0 0.0
      %888 = vmatprep.subr.mxu0 0.0
      %889 = vmatpush1.msra.mxu0 0.0
      %890 = vmatprep.subr.mxu0 0.0
      %891 = vmatpush1.msra.mxu0 0.0
      %892 = vmatprep.subr.mxu0 0.0
      %893 = vmatpush1.msra.mxu0 0.0
      %894 = vmatprep.subr.mxu0 0.0
      %895 = vmatpush1.msra.mxu0 0.0
      %896 = vmatprep.mubr.f32.mxu0 0.0
      %897 = vmatmul.mubr.f32.gmra.mrb[0].mxu0 %v781
      %v898 = vpop.f32.mrb[0].mxu0
      %v899 = vadd.f32 %v777, %v898
      %v900 = vpop.f32.mrb[0].mxu0
      %901 = vmatprep.mubr.f32.mxu0 0.0
      %902 = vmatmul.mubr.f32.gmra.mrb[0].mxu0 %v784
      %v903 = vpop.f32.mrb[0].mxu0
      %v904 = vadd.f32 %v777, %v903
      %v905 = vpop.f32.mrb[0].mxu0
      %906 = vmatprep.mubr.f32.mxu0 0.0
      %907 = vmatmul.mubr.f32.gmra.mrb[0].mxu0 %v787
      %v908 = vpop.f32.mrb[0].mxu0
      %v909 = vadd.f32 %v777, %v908
      %v910 = vpop.f32.mrb[0].mxu0
      %911 = vmatprep.mubr.f32.mxu0 0.0
      %912 = vmatmul.mubr.f32.gmra.mrb[0].mxu0 %v790
      %v913 = vpop.f32.mrb[0].mxu0
      %v914 = vadd.f32 %v777, %v913
      %v915 = vpop.f32.mrb[0].mxu0
      %916 = vmatprep.mubr.f32.mxu0 0.0
      %917 = vmatmul.mubr.f32.gmra.mrb[0].mxu0 %v793
      %v918 = vpop.f32.mrb[0].mxu0
      %v919 = vadd.f32 %v777, %v918
      %v920 = vpop.f32.mrb[0].mxu0
      %921 = vmatprep.mubr.f32.mxu0 0.0
      %922 = vmatmul.mubr.f32.gmra.mrb[0].mxu0 %v796
      %v923 = vpop.f32.mrb[0].mxu0
      %v924 = vadd.f32 %v777, %v923
      %v925 = vpop.f32.mrb[0].mxu0
      %926 = vmatprep.mubr.f32.mxu0 0.0
      %927 = vmatmul.mubr.f32.gmra.mrb[0].mxu0 %v799
      %v928 = vpop.f32.mrb[0].mxu0
      %v929 = vadd.f32 %v777, %v928
      %v930 = vpop.f32.mrb[0].mxu0
      %931 = vmatprep.mubr.f32.mxu0 0.0
      %932 = vmatmul.mubr.f32.gmra.mrb[0].mxu0 %v802
      %v933 = vpop.f32.mrb[0].mxu0
      %v934 = vadd.f32 %v777, %v933
      %v935 = vpop.f32.mrb[0].mxu0
      %936 = vmatprep.mubr.f32.mxu0 0.0
      %937 = vmatmul.mubr.f32.gmra.mrb[0].mxu0 %v805
      %v938 = vpop.f32.mrb[0].mxu0
      %v939 = vadd.f32 %v777, %v938
      %v940 = vpop.f32.mrb[0].mxu0
      %941 = vmatprep.mubr.f32.mxu0 0.0
      %942 = vmatmul.mubr.f32.gmra.mrb[0].mxu0 %v808
      %v943 = vpop.f32.mrb[0].mxu0
      %v944 = vadd.f32 %v777, %v943
      %v945 = vpop.f32.mrb[0].mxu0
      %946 = vmatprep.mubr.f32.mxu0 0.0
      %947 = vmatmul.mubr.f32.gmra.mrb[0].mxu0 %v811
      %v948 = vpop.f32.mrb[0].mxu0
      %v949 = vadd.f32 %v777, %v948
      %v950 = vpop.f32.mrb[0].mxu0
      %951 = vmatprep.mubr.f32.mxu0 0.0
      %952 = vmatmul.mubr.f32.gmra.mrb[0].mxu0 %v814
      %v953 = vpop.f32.mrb[0].mxu0
      %v954 = vadd.f32 %v777, %v953
      %v955 = vpop.f32.mrb[0].mxu0
      %956 = vmatprep.mubr.f32.mxu0 0.0
      %957 = vmatmul.mubr.f32.gmra.mrb[0].mxu0 %v817
      %v958 = vpop.f32.mrb[0].mxu0
      %v959 = vadd.f32 %v777, %v958
      %v960 = vpop.f32.mrb[0].mxu0
      %961 = vmatprep.mubr.f32.mxu0 0.0
      %962 = vmatmul.mubr.f32.gmra.mrb[0].mxu0 %v820
      %v963 = vpop.f32.mrb[0].mxu0
      %v964 = vadd.f32 %v777, %v963
      %v965 = vpop.f32.mrb[0].mxu0
      %966 = vmatprep.mubr.f32.mxu0 0.0
      %967 = vmatmul.mubr.f32.gmra.mrb[0].mxu0 %v823
      %v968 = vpop.f32.mrb[0].mxu0
      %v969 = vadd.f32 %v777, %v968
      %v970 = vpop.f32.mrb[0].mxu0
      %971 = vmatprep.mubr.f32.mxu0 0.0
      %972 = vmatmul.mubr.f32.gmra.mrb[0].mxu0 %v826
      %v973 = vpop.f32.mrb[0].mxu0
      %v974 = vadd.f32 %v777, %v973
      %v975 = vpop.f32.mrb[0].mxu0
      %976 = vdwg.mxu0
      %v977 = vld [vmem:[#allocation2] sm:$0xff]
      %v978 = vld [vmem:[#allocation2 + $0x8] sm:$0xff]
      %v979 = vld [vmem:[#allocation2 + $0x10] sm:$0xff]
      %v980 = vld [vmem:[#allocation2 + $0x18] sm:$0xff]
      %v981 = vld [vmem:[#allocation2 + $0x20] sm:$0xff]
      %v982 = vld [vmem:[#allocation2 + $0x28] sm:$0xff]
      %v983 = vld [vmem:[#allocation2 + $0x30] sm:$0xff]
      %v984 = vld [vmem:[#allocation2 + $0x38] sm:$0xff]
      %vm985 = vcmask 15360
      %v987 = vsel %vm985, %v899, 0
      %v990 = vsel %vm985, %v904, 0
      %v993 = vsel %vm985, %v909, 0
      %v996 = vsel %vm985, %v914, 0
      %v999 = vsel %vm985, %v919, 0
      %v1002 = vsel %vm985, %v924, 0
      %v1005 = vsel %vm985, %v929, 0
      %v1008 = vsel %vm985, %v934, 0
      %v1011 = vsel %vm985, %v939, 0
      %v1014 = vsel %vm985, %v944, 0
      %v1017 = vsel %vm985, %v949, 0
      %v1020 = vsel %vm985, %v954, 0
      %v1023 = vsel %vm985, %v959, 0
      %v1026 = vsel %vm985, %v964, 0
      %v1029 = vsel %vm985, %v969, 0
      %v1032 = vsel %vm985, %v974, 0
      %v1035 = vsel %vm985, %v977, 0
      %v1038 = vsel %vm985, %v978, 0
      %v1041 = vsel %vm985, %v979, 0
      %v1044 = vsel %vm985, %v980, 0
      %v1047 = vsel %vm985, %v981, 0
      %v1050 = vsel %vm985, %v982, 0
      %v1053 = vsel %vm985, %v983, 0
      %v1056 = vsel %vm985, %v984, 0
      %1058 = vmatprep.subr.mxu0 0.0
      %1059 = vmatpush1.xpose.msra.mxu0 %v1035
      %1060 = vmatprep.subr.mxu0 0.0
      %1061 = vmatpush1.xpose.msra.mxu0 %v1038
      %1062 = vmatprep.subr.mxu0 0.0
      %1063 = vmatpush1.xpose.msra.mxu0 %v1041
      %1064 = vmatprep.subr.mxu0 0.0
      %1065 = vmatpush1.xpose.msra.mxu0 %v1044
      %1066 = vmatprep.subr.mxu0 0.0
      %1067 = vmatpush1.xpose.msra.mxu0 %v1047
      %1068 = vmatprep.subr.mxu0 0.0
      %1069 = vmatpush1.xpose.msra.mxu0 %v1050
      %1070 = vmatprep.subr.mxu0 0.0
      %1071 = vmatpush1.xpose.msra.mxu0 %v1053
      %1072 = vmatprep.subr.mxu0 0.0
      %1073 = vmatpush1.xpose.msra.mxu0 %v1056
      %1074 = vmatprep.subr.mxu0 0.0
      %1075 = vmatpush1.xpose.msra.mxu0 0.0
      %1076 = vmatprep.subr.mxu0 0.0
      %1077 = vmatpush1.xpose.msra.mxu0 0.0
      %1078 = vmatprep.subr.mxu0 0.0
      %1079 = vmatpush1.xpose.msra.mxu0 0.0
      %1080 = vmatprep.subr.mxu0 0.0
      %1081 = vmatpush1.xpose.msra.mxu0 0.0
      %1082 = vmatprep.subr.mxu0 0.0
      %1083 = vmatpush1.xpose.msra.mxu0 0.0
      %1084 = vmatprep.subr.mxu0 0.0
      %1085 = vmatpush1.xpose.msra.mxu0 0.0
      %1086 = vmatprep.subr.mxu0 0.0
      %1087 = vmatpush1.xpose.msra.mxu0 0.0
      %1088 = vmatprep.subr.mxu0 0.0
      %1089 = vmatpush1.xpose.msra.mxu0 0.0
      %1090 = vmatprep.subr.mxu0 0.0
      %1091 = vmatpush1.xpose.msra.mxu0 0.0
      %1092 = vmatprep.subr.mxu0 0.0
      %1093 = vmatpush1.xpose.msra.mxu0 0.0
      %1094 = vmatprep.subr.mxu0 0.0
      %1095 = vmatpush1.xpose.msra.mxu0 0.0
      %1096 = vmatprep.subr.mxu0 0.0
      %1097 = vmatpush1.xpose.msra.mxu0 0.0
      %1098 = vmatprep.subr.mxu0 0.0
      %1099 = vmatpush1.xpose.msra.mxu0 0.0
      %1100 = vmatprep.subr.mxu0 0.0
      %1101 = vmatpush1.xpose.msra.mxu0 0.0
      %1102 = vmatprep.subr.mxu0 0.0
      %1103 = vmatpush1.xpose.msra.mxu0 0.0
      %1104 = vmatprep.subr.mxu0 0.0
      %1105 = vmatpush1.xpose.msra.mxu0 0.0
      %1106 = vmatprep.subr.mxu0 0.0
      %1107 = vmatpush1.xpose.msra.mxu0 0.0
      %1108 = vmatprep.subr.mxu0 0.0
      %1109 = vmatpush1.xpose.msra.mxu0 0.0
      %1110 = vmatprep.subr.mxu0 0.0
      %1111 = vmatpush1.xpose.msra.mxu0 0.0
      %1112 = vmatprep.subr.mxu0 0.0
      %1113 = vmatpush1.xpose.msra.mxu0 0.0
      %1114 = vmatprep.subr.mxu0 0.0
      %1115 = vmatpush1.xpose.msra.mxu0 0.0
      %1116 = vmatprep.subr.mxu0 0.0
      %1117 = vmatpush1.xpose.msra.mxu0 0.0
      %1118 = vmatprep.subr.mxu0 0.0
      %1119 = vmatpush1.xpose.msra.mxu0 0.0
      %1120 = vmatprep.subr.mxu0 0.0
      %1121 = vmatpush1.xpose.msra.mxu0 0.0
      %1122 = vmatprep.mubr.f32.mxu0 0.0
      %1123 = vmatmul.mubr.f32.gmra.mrb[0].mxu0 %v987
      %v1124 = vpop.f32.mrb[0].mxu0
      %v1125 = vadd.f32 0.0, %v1124
      %v1126 = vpop.f32.mrb[0].mxu0
      %1127 = vmatprep.mubr.f32.mxu0 0.0
      %1128 = vmatmul.mubr.f32.gmra.mrb[0].mxu0 %v990
      %v1129 = vpop.f32.mrb[0].mxu0
      %v1130 = vadd.f32 0.0, %v1129
      %v1131 = vpop.f32.mrb[0].mxu0
      %1132 = vmatprep.mubr.f32.mxu0 0.0
      %1133 = vmatmul.mubr.f32.gmra.mrb[0].mxu0 %v993
      %v1134 = vpop.f32.mrb[0].mxu0
      %v1135 = vadd.f32 0.0, %v1134
      %v1136 = vpop.f32.mrb[0].mxu0
      %1137 = vmatprep.mubr.f32.mxu0 0.0
      %1138 = vmatmul.mubr.f32.gmra.mrb[0].mxu0 %v996
      %v1139 = vpop.f32.mrb[0].mxu0
      %v1140 = vadd.f32 0.0, %v1139
      %v1141 = vpop.f32.mrb[0].mxu0
      %1142 = vmatprep.mubr.f32.mxu0 0.0
      %1143 = vmatmul.mubr.f32.gmra.mrb[0].mxu0 %v999
      %v1144 = vpop.f32.mrb[0].mxu0
      %v1145 = vadd.f32 0.0, %v1144
      %v1146 = vpop.f32.mrb[0].mxu0
      %1147 = vmatprep.mubr.f32.mxu0 0.0
      %1148 = vmatmul.mubr.f32.gmra.mrb[0].mxu0 %v1002
      %v1149 = vpop.f32.mrb[0].mxu0
      %v1150 = vadd.f32 0.0, %v1149
      %v1151 = vpop.f32.mrb[0].mxu0
      %1152 = vmatprep.mubr.f32.mxu0 0.0
      %1153 = vmatmul.mubr.f32.gmra.mrb[0].mxu0 %v1005
      %v1154 = vpop.f32.mrb[0].mxu0
      %v1155 = vadd.f32 0.0, %v1154
      %v1156 = vpop.f32.mrb[0].mxu0
      %1157 = vmatprep.mubr.f32.mxu0 0.0
      %1158 = vmatmul.mubr.f32.gmra.mrb[0].mxu0 %v1008
      %v1159 = vpop.f32.mrb[0].mxu0
      %v1160 = vadd.f32 0.0, %v1159
      %v1161 = vpop.f32.mrb[0].mxu0
      %1162 = vmatprep.mubr.f32.mxu0 0.0
      %1163 = vmatmul.mubr.f32.gmra.mrb[0].mxu0 %v1011
      %v1164 = vpop.f32.mrb[0].mxu0
      %v1165 = vadd.f32 0.0, %v1164
      %v1166 = vpop.f32.mrb[0].mxu0
      %1167 = vmatprep.mubr.f32.mxu0 0.0
      %1168 = vmatmul.mubr.f32.gmra.mrb[0].mxu0 %v1014
      %v1169 = vpop.f32.mrb[0].mxu0
      %v1170 = vadd.f32 0.0, %v1169
      %v1171 = vpop.f32.mrb[0].mxu0
      %1172 = vmatprep.mubr.f32.mxu0 0.0
      %1173 = vmatmul.mubr.f32.gmra.mrb[0].mxu0 %v1017
      %v1174 = vpop.f32.mrb[0].mxu0
      %v1175 = vadd.f32 0.0, %v1174
      %v1176 = vpop.f32.mrb[0].mxu0
      %1177 = vmatprep.mubr.f32.mxu0 0.0
      %1178 = vmatmul.mubr.f32.gmra.mrb[0].mxu0 %v1020
      %v1179 = vpop.f32.mrb[0].mxu0
      %v1180 = vadd.f32 0.0, %v1179
      %v1181 = vpop.f32.mrb[0].mxu0
      %1182 = vmatprep.mubr.f32.mxu0 0.0
      %1183 = vmatmul.mubr.f32.gmra.mrb[0].mxu0 %v1023
      %v1184 = vpop.f32.mrb[0].mxu0
      %v1185 = vadd.f32 0.0, %v1184
      %v1186 = vpop.f32.mrb[0].mxu0
      %1187 = vmatprep.mubr.f32.mxu0 0.0
      %1188 = vmatmul.mubr.f32.gmra.mrb[0].mxu0 %v1026
      %v1189 = vpop.f32.mrb[0].mxu0
      %v1190 = vadd.f32 0.0, %v1189
      %v1191 = vpop.f32.mrb[0].mxu0
      %1192 = vmatprep.mubr.f32.mxu0 0.0
      %1193 = vmatmul.mubr.f32.gmra.mrb[0].mxu0 %v1029
      %v1194 = vpop.f32.mrb[0].mxu0
      %v1195 = vadd.f32 0.0, %v1194
      %v1196 = vpop.f32.mrb[0].mxu0
      %1197 = vmatprep.mubr.f32.mxu0 0.0
      %1198 = vmatmul.mubr.f32.gmra.mrb[0].mxu0 %v1032
      %v1199 = vpop.f32.mrb[0].mxu0
      %v1200 = vadd.f32 0.0, %v1199
      %v1201 = vpop.f32.mrb[0].mxu0
      %1202 = vdwg.mxu0
      %vm1203 = vcmask 523264
      %v1204 = vsel %vm1203, %v1125, -inf
      %1205 = vmax.xlane.f32.xlu0 %v1204
      %v1206 = vpop.xlane.xlu0 %1205
      %v1207 = vsel %vm1203, %v1130, -inf
      %1208 = vmax.xlane.f32.xlu0 %v1207
      %v1209 = vpop.xlane.xlu0 %1208
      %v1210 = vsel %vm1203, %v1135, -inf
      %1211 = vmax.xlane.f32.xlu0 %v1210
      %v1212 = vpop.xlane.xlu0 %1211
      %v1213 = vsel %vm1203, %v1140, -inf
      %1214 = vmax.xlane.f32.xlu0 %v1213
      %v1215 = vpop.xlane.xlu0 %1214
      %v1216 = vsel %vm1203, %v1145, -inf
      %1217 = vmax.xlane.f32.xlu0 %v1216
      %v1218 = vpop.xlane.xlu0 %1217
      %v1219 = vsel %vm1203, %v1150, -inf
      %1220 = vmax.xlane.f32.xlu0 %v1219
      %v1221 = vpop.xlane.xlu0 %1220
      %v1222 = vsel %vm1203, %v1155, -inf
      %1223 = vmax.xlane.f32.xlu0 %v1222
      %v1224 = vpop.xlane.xlu0 %1223
      %v1225 = vsel %vm1203, %v1160, -inf
      %1226 = vmax.xlane.f32.xlu0 %v1225
      %v1227 = vpop.xlane.xlu0 %1226
      %v1228 = vsel %vm1203, %v1165, -inf
      %1229 = vmax.xlane.f32.xlu0 %v1228
      %v1230 = vpop.xlane.xlu0 %1229
      %v1231 = vsel %vm1203, %v1170, -inf
      %1232 = vmax.xlane.f32.xlu0 %v1231
      %v1233 = vpop.xlane.xlu0 %1232
      %v1234 = vsel %vm1203, %v1175, -inf
      %1235 = vmax.xlane.f32.xlu0 %v1234
      %v1236 = vpop.xlane.xlu0 %1235
      %v1237 = vsel %vm1203, %v1180, -inf
      %1238 = vmax.xlane.f32.xlu0 %v1237
      %v1239 = vpop.xlane.xlu0 %1238
      %v1240 = vsel %vm1203, %v1185, -inf
      %1241 = vmax.xlane.f32.xlu0 %v1240
      %v1242 = vpop.xlane.xlu0 %1241
      %v1243 = vsel %vm1203, %v1190, -inf
      %1244 = vmax.xlane.f32.xlu0 %v1243
      %v1245 = vpop.xlane.xlu0 %1244
      %v1246 = vsel %vm1203, %v1195, -inf
      %1247 = vmax.xlane.f32.xlu0 %v1246
      %v1248 = vpop.xlane.xlu0 %1247
      %v1249 = vsel %vm1203, %v1200, -inf
      %1250 = vmax.xlane.f32.xlu0 %v1249
      %v1251 = vpop.xlane.xlu0 %1250
      %v1252 = vsub.f32 %v1125, %v1206
      %v1253 = vsub.f32 %v1130, %v1209
      %v1254 = vsub.f32 %v1135, %v1212
      %v1255 = vsub.f32 %v1140, %v1215
      %v1256 = vsub.f32 %v1145, %v1218
      %v1257 = vsub.f32 %v1150, %v1221
      %v1258 = vsub.f32 %v1155, %v1224
      %v1259 = vsub.f32 %v1160, %v1227
      %v1260 = vsub.f32 %v1165, %v1230
      %v1261 = vsub.f32 %v1170, %v1233
      %v1262 = vsub.f32 %v1175, %v1236
      %v1263 = vsub.f32 %v1180, %v1239
      %v1264 = vsub.f32 %v1185, %v1242
      %v1265 = vsub.f32 %v1190, %v1245
      %v1266 = vsub.f32 %v1195, %v1248
      %v1267 = vsub.f32 %v1200, %v1251
      %v1268 = vmul.f32 %v1252, 1.442695
      %v1269 = vpow.pop %v1268
      %v1270 = vmul.f32 %v1253, 1.442695
      %v1271 = vpow.pop %v1270
      %v1272 = vmul.f32 %v1254, 1.442695
      %v1273 = vpow.pop %v1272
      %v1274 = vmul.f32 %v1255, 1.442695
      %v1275 = vpow.pop %v1274
      %v1276 = vmul.f32 %v1256, 1.442695
      %v1277 = vpow.pop %v1276
      %v1278 = vmul.f32 %v1257, 1.442695
      %v1279 = vpow.pop %v1278
      %v1280 = vmul.f32 %v1258, 1.442695
      %v1281 = vpow.pop %v1280
      %v1282 = vmul.f32 %v1259, 1.442695
      %v1283 = vpow.pop %v1282
      %v1284 = vmul.f32 %v1260, 1.442695
      %v1285 = vpow.pop %v1284
      %v1286 = vmul.f32 %v1261, 1.442695
      %v1287 = vpow.pop %v1286
      %v1288 = vmul.f32 %v1262, 1.442695
      %v1289 = vpow.pop %v1288
      %v1290 = vmul.f32 %v1263, 1.442695
      %v1291 = vpow.pop %v1290
      %v1292 = vmul.f32 %v1264, 1.442695
      %v1293 = vpow.pop %v1292
      %v1294 = vmul.f32 %v1265, 1.442695
      %v1295 = vpow.pop %v1294
      %v1296 = vmul.f32 %v1266, 1.442695
      %v1297 = vpow.pop %v1296
      %v1298 = vmul.f32 %v1267, 1.442695
      %v1299 = vpow.pop %v1298
      %v1300 = vsel %vm1203, %v1269, 0.0
      %1301 = vadd.xlane.f32.xlu0 %v1300
      %v1302 = vpop.xlane.xlu0 %1301
      %v1303 = vsel %vm1203, %v1271, 0.0
      %1304 = vadd.xlane.f32.xlu0 %v1303
      %v1305 = vpop.xlane.xlu0 %1304
      %v1306 = vsel %vm1203, %v1273, 0.0
      %1307 = vadd.xlane.f32.xlu0 %v1306
      %v1308 = vpop.xlane.xlu0 %1307
      %v1309 = vsel %vm1203, %v1275, 0.0
      %1310 = vadd.xlane.f32.xlu0 %v1309
      %v1311 = vpop.xlane.xlu0 %1310
      %v1312 = vsel %vm1203, %v1277, 0.0
      %1313 = vadd.xlane.f32.xlu0 %v1312
      %v1314 = vpop.xlane.xlu0 %1313
      %v1315 = vsel %vm1203, %v1279, 0.0
      %1316 = vadd.xlane.f32.xlu0 %v1315
      %v1317 = vpop.xlane.xlu0 %1316
      %v1318 = vsel %vm1203, %v1281, 0.0
      %1319 = vadd.xlane.f32.xlu0 %v1318
      %v1320 = vpop.xlane.xlu0 %1319
      %v1321 = vsel %vm1203, %v1283, 0.0
      %1322 = vadd.xlane.f32.xlu0 %v1321
      %v1323 = vpop.xlane.xlu0 %1322
      %v1324 = vsel %vm1203, %v1285, 0.0
      %1325 = vadd.xlane.f32.xlu0 %v1324
      %v1326 = vpop.xlane.xlu0 %1325
      %v1327 = vsel %vm1203, %v1287, 0.0
      %1328 = vadd.xlane.f32.xlu0 %v1327
      %v1329 = vpop.xlane.xlu0 %1328
      %v1330 = vsel %vm1203, %v1289, 0.0
      %1331 = vadd.xlane.f32.xlu0 %v1330
      %v1332 = vpop.xlane.xlu0 %1331
      %v1333 = vsel %vm1203, %v1291, 0.0
      %1334 = vadd.xlane.f32.xlu0 %v1333
      %v1335 = vpop.xlane.xlu0 %1334
      %v1336 = vsel %vm1203, %v1293, 0.0
      %1337 = vadd.xlane.f32.xlu0 %v1336
      %v1338 = vpop.xlane.xlu0 %1337
      %v1339 = vsel %vm1203, %v1295, 0.0
      %1340 = vadd.xlane.f32.xlu0 %v1339
      %v1341 = vpop.xlane.xlu0 %1340
      %v1342 = vsel %vm1203, %v1297, 0.0
      %1343 = vadd.xlane.f32.xlu0 %v1342
      %v1344 = vpop.xlane.xlu0 %1343
      %v1345 = vsel %vm1203, %v1299, 0.0
      %1346 = vadd.xlane.f32.xlu0 %v1345
      %v1347 = vpop.xlane.xlu0 %1346
      %v1348 = vld [vmem:[#allocation3] sm:$0xff]
      %v1349 = vld [vmem:[#allocation3 + $0x8] sm:$0xff]
      %v1350 = vld [vmem:[#allocation3 + $0x10] sm:$0xff]
      %v1351 = vld [vmem:[#allocation3 + $0x18] sm:$0xff]
      %v1352 = vld [vmem:[#allocation3 + $0x20] sm:$0xff]
      %v1353 = vld [vmem:[#allocation3 + $0x28] sm:$0xff]
      %v1354 = vld [vmem:[#allocation3 + $0x30] sm:$0xff]
      %v1355 = vld [vmem:[#allocation3 + $0x38] sm:$0xff]
      %v1357 = vsel %vm1203, %v1269, 0
      %v1360 = vsel %vm1203, %v1271, 0
      %v1363 = vsel %vm1203, %v1273, 0
      %v1366 = vsel %vm1203, %v1275, 0
      %v1369 = vsel %vm1203, %v1277, 0
      %v1372 = vsel %vm1203, %v1279, 0
      %v1375 = vsel %vm1203, %v1281, 0
      %v1378 = vsel %vm1203, %v1283, 0
      %v1381 = vsel %vm1203, %v1285, 0
      %v1384 = vsel %vm1203, %v1287, 0
      %v1387 = vsel %vm1203, %v1289, 0
      %v1390 = vsel %vm1203, %v1291, 0
      %v1393 = vsel %vm1203, %v1293, 0
      %v1396 = vsel %vm1203, %v1295, 0
      %v1399 = vsel %vm1203, %v1297, 0
      %v1402 = vsel %vm1203, %v1299, 0
      %1404 = vmatprep.subr.mxu0 0.0
      %1405 = vmatpush1.msra.mxu0 %v1348
      %1406 = vmatprep.subr.mxu0 0.0
      %1407 = vmatpush1.msra.mxu0 %v1349
      %1408 = vmatprep.subr.mxu0 0.0
      %1409 = vmatpush1.msra.mxu0 %v1350
      %1410 = vmatprep.subr.mxu0 0.0
      %1411 = vmatpush1.msra.mxu0 %v1351
      %1412 = vmatprep.subr.mxu0 0.0
      %1413 = vmatpush1.msra.mxu0 %v1352
      %1414 = vmatprep.subr.mxu0 0.0
      %1415 = vmatpush1.msra.mxu0 %v1353
      %1416 = vmatprep.subr.mxu0 0.0
      %1417 = vmatpush1.msra.mxu0 %v1354
      %1418 = vmatprep.subr.mxu0 0.0
      %1419 = vmatpush1.msra.mxu0 %v1355
      %1420 = vmatprep.subr.mxu0 0.0
      %1421 = vmatpush1.msra.mxu0 0.0
      %1422 = vmatprep.subr.mxu0 0.0
      %1423 = vmatpush1.msra.mxu0 0.0
      %1424 = vmatprep.subr.mxu0 0.0
      %1425 = vmatpush1.msra.mxu0 0.0
      %1426 = vmatprep.subr.mxu0 0.0
      %1427 = vmatpush1.msra.mxu0 0.0
      %1428 = vmatprep.subr.mxu0 0.0
      %1429 = vmatpush1.msra.mxu0 0.0
      %1430 = vmatprep.subr.mxu0 0.0
      %1431 = vmatpush1.msra.mxu0 0.0
      %1432 = vmatprep.subr.mxu0 0.0
      %1433 = vmatpush1.msra.mxu0 0.0
      %1434 = vmatprep.subr.mxu0 0.0
      %1435 = vmatpush1.msra.mxu0 0.0
      %1436 = vmatprep.subr.mxu0 0.0
      %1437 = vmatpush1.msra.mxu0 0.0
      %1438 = vmatprep.subr.mxu0 0.0
      %1439 = vmatpush1.msra.mxu0 0.0
      %1440 = vmatprep.subr.mxu0 0.0
      %1441 = vmatpush1.msra.mxu0 0.0
      %1442 = vmatprep.subr.mxu0 0.0
      %1443 = vmatpush1.msra.mxu0 0.0
      %1444 = vmatprep.subr.mxu0 0.0
      %1445 = vmatpush1.msra.mxu0 0.0
      %1446 = vmatprep.subr.mxu0 0.0
      %1447 = vmatpush1.msra.mxu0 0.0
      %1448 = vmatprep.subr.mxu0 0.0
      %1449 = vmatpush1.msra.mxu0 0.0
      %1450 = vmatprep.subr.mxu0 0.0
      %1451 = vmatpush1.msra.mxu0 0.0
      %1452 = vmatprep.subr.mxu0 0.0
      %1453 = vmatpush1.msra.mxu0 0.0
      %1454 = vmatprep.subr.mxu0 0.0
      %1455 = vmatpush1.msra.mxu0 0.0
      %1456 = vmatprep.subr.mxu0 0.0
      %1457 = vmatpush1.msra.mxu0 0.0
      %1458 = vmatprep.subr.mxu0 0.0
      %1459 = vmatpush1.msra.mxu0 0.0
      %1460 = vmatprep.subr.mxu0 0.0
      %1461 = vmatpush1.msra.mxu0 0.0
      %1462 = vmatprep.subr.mxu0 0.0
      %1463 = vmatpush1.msra.mxu0 0.0
      %1464 = vmatprep.subr.mxu0 0.0
      %1465 = vmatpush1.msra.mxu0 0.0
      %1466 = vmatprep.subr.mxu0 0.0
      %1467 = vmatpush1.msra.mxu0 0.0
      %1468 = vmatprep.mubr.f32.mxu0 0.0
      %1469 = vmatmul.mubr.f32.gmra.mrb[0].mxu0 %v1357
      %v1470 = vpop.f32.mrb[0].mxu0
      %v1471 = vadd.f32 0.0, %v1470
      %v1472 = vpop.f32.mrb[0].mxu0
      %1473 = vmatprep.mubr.f32.mxu0 0.0
      %1474 = vmatmul.mubr.f32.gmra.mrb[0].mxu0 %v1360
      %v1475 = vpop.f32.mrb[0].mxu0
      %v1476 = vadd.f32 0.0, %v1475
      %v1477 = vpop.f32.mrb[0].mxu0
      %1478 = vmatprep.mubr.f32.mxu0 0.0
      %1479 = vmatmul.mubr.f32.gmra.mrb[0].mxu0 %v1363
      %v1480 = vpop.f32.mrb[0].mxu0
      %v1481 = vadd.f32 0.0, %v1480
      %v1482 = vpop.f32.mrb[0].mxu0
      %1483 = vmatprep.mubr.f32.mxu0 0.0
      %1484 = vmatmul.mubr.f32.gmra.mrb[0].mxu0 %v1366
      %v1485 = vpop.f32.mrb[0].mxu0
      %v1486 = vadd.f32 0.0, %v1485
      %v1487 = vpop.f32.mrb[0].mxu0
      %1488 = vmatprep.mubr.f32.mxu0 0.0
      %1489 = vmatmul.mubr.f32.gmra.mrb[0].mxu0 %v1369
      %v1490 = vpop.f32.mrb[0].mxu0
      %v1491 = vadd.f32 0.0, %v1490
      %v1492 = vpop.f32.mrb[0].mxu0
      %1493 = vmatprep.mubr.f32.mxu0 0.0
      %1494 = vmatmul.mubr.f32.gmra.mrb[0].mxu0 %v1372
      %v1495 = vpop.f32.mrb[0].mxu0
      %v1496 = vadd.f32 0.0, %v1495
      %v1497 = vpop.f32.mrb[0].mxu0
      %1498 = vmatprep.mubr.f32.mxu0 0.0
      %1499 = vmatmul.mubr.f32.gmra.mrb[0].mxu0 %v1375
      %v1500 = vpop.f32.mrb[0].mxu0
      %v1501 = vadd.f32 0.0, %v1500
      %v1502 = vpop.f32.mrb[0].mxu0
      %1503 = vmatprep.mubr.f32.mxu0 0.0
      %1504 = vmatmul.mubr.f32.gmra.mrb[0].mxu0 %v1378
      %v1505 = vpop.f32.mrb[0].mxu0
      %v1506 = vadd.f32 0.0, %v1505
      %v1507 = vpop.f32.mrb[0].mxu0
      %1508 = vmatprep.mubr.f32.mxu0 0.0
      %1509 = vmatmul.mubr.f32.gmra.mrb[0].mxu0 %v1381
      %v1510 = vpop.f32.mrb[0].mxu0
      %v1511 = vadd.f32 0.0, %v1510
      %v1512 = vpop.f32.mrb[0].mxu0
      %1513 = vmatprep.mubr.f32.mxu0 0.0
      %1514 = vmatmul.mubr.f32.gmra.mrb[0].mxu0 %v1384
      %v1515 = vpop.f32.mrb[0].mxu0
      %v1516 = vadd.f32 0.0, %v1515
      %v1517 = vpop.f32.mrb[0].mxu0
      %1518 = vmatprep.mubr.f32.mxu0 0.0
      %1519 = vmatmul.mubr.f32.gmra.mrb[0].mxu0 %v1387
      %v1520 = vpop.f32.mrb[0].mxu0
      %v1521 = vadd.f32 0.0, %v1520
      %v1522 = vpop.f32.mrb[0].mxu0
      %1523 = vmatprep.mubr.f32.mxu0 0.0
      %1524 = vmatmul.mubr.f32.gmra.mrb[0].mxu0 %v1390
      %v1525 = vpop.f32.mrb[0].mxu0
      %v1526 = vadd.f32 0.0, %v1525
      %v1527 = vpop.f32.mrb[0].mxu0
      %1528 = vmatprep.mubr.f32.mxu0 0.0
      %1529 = vmatmul.mubr.f32.gmra.mrb[0].mxu0 %v1393
      %v1530 = vpop.f32.mrb[0].mxu0
      %v1531 = vadd.f32 0.0, %v1530
      %v1532 = vpop.f32.mrb[0].mxu0
      %1533 = vmatprep.mubr.f32.mxu0 0.0
      %1534 = vmatmul.mubr.f32.gmra.mrb[0].mxu0 %v1396
      %v1535 = vpop.f32.mrb[0].mxu0
      %v1536 = vadd.f32 0.0, %v1535
      %v1537 = vpop.f32.mrb[0].mxu0
      %1538 = vmatprep.mubr.f32.mxu0 0.0
      %1539 = vmatmul.mubr.f32.gmra.mrb[0].mxu0 %v1399
      %v1540 = vpop.f32.mrb[0].mxu0
      %v1541 = vadd.f32 0.0, %v1540
      %v1542 = vpop.f32.mrb[0].mxu0
      %1543 = vmatprep.mubr.f32.mxu0 0.0
      %1544 = vmatmul.mubr.f32.gmra.mrb[0].mxu0 %v1402
      %v1545 = vpop.f32.mrb[0].mxu0
      %v1546 = vadd.f32 0.0, %v1545
      %v1547 = vpop.f32.mrb[0].mxu0
      %1548 = vdwg.mxu0
      %v1549 = vrcp.pop %v1302
      %v1550 = vrcp.pop %v1305
      %v1551 = vrcp.pop %v1308
      %v1552 = vrcp.pop %v1311
      %v1553 = vrcp.pop %v1314
      %v1554 = vrcp.pop %v1317
      %v1555 = vrcp.pop %v1320
      %v1556 = vrcp.pop %v1323
      %v1557 = vrcp.pop %v1326
      %v1558 = vrcp.pop %v1329
      %v1559 = vrcp.pop %v1332
      %v1560 = vrcp.pop %v1335
      %v1561 = vrcp.pop %v1338
      %v1562 = vrcp.pop %v1341
      %v1563 = vrcp.pop %v1344
      %v1564 = vrcp.pop %v1347
      %v1565 = vmul.f32 %v1471, %v1549
      %v1566 = vmul.f32 %v1476, %v1550
      %v1567 = vmul.f32 %v1481, %v1551
      %v1568 = vmul.f32 %v1486, %v1552
      %v1569 = vmul.f32 %v1491, %v1553
      %v1570 = vmul.f32 %v1496, %v1554
      %v1571 = vmul.f32 %v1501, %v1555
      %v1572 = vmul.f32 %v1506, %v1556
      %v1573 = vmul.f32 %v1511, %v1557
      %v1574 = vmul.f32 %v1516, %v1558
      %v1575 = vmul.f32 %v1521, %v1559
      %v1576 = vmul.f32 %v1526, %v1560
      %v1577 = vmul.f32 %v1531, %v1561
      %v1578 = vmul.f32 %v1536, %v1562
      %v1579 = vmul.f32 %v1541, %v1563
      %v1580 = vmul.f32 %v1546, %v1564
      %v1581 = vld [vmem:[%s5] sm:$0x3]
      %v1582 = vld [vmem:[%s6] sm:$0x1]
      %v1584 = vlaneseq
      %v1585 = vshrl.u32 %v1584, 7
      %v1586 = vsub.s32 0, %v1585
      %v1587 = vrot.slane %v1582, %v1586
      %v1590 = vsel %vm985, %v1565, 0
      %v1593 = vsel %vm985, %v1566, 0
      %v1596 = vsel %vm985, %v1567, 0
      %v1599 = vsel %vm985, %v1568, 0
      %v1602 = vsel %vm985, %v1569, 0
      %v1605 = vsel %vm985, %v1570, 0
      %v1608 = vsel %vm985, %v1571, 0
      %v1611 = vsel %vm985, %v1572, 0
      %v1614 = vsel %vm985, %v1573, 0
      %v1617 = vsel %vm985, %v1574, 0
      %v1620 = vsel %vm985, %v1575, 0
      %v1623 = vsel %vm985, %v1576, 0
      %v1626 = vsel %vm985, %v1577, 0
      %v1629 = vsel %vm985, %v1578, 0
      %v1632 = vsel %vm985, %v1579, 0
      %v1635 = vsel %vm985, %v1580, 0
      %vm1637 = vcmask 1041408
      %v1639 = vsel %vm1637, %v1581, 0
      %1641 = vmatprep.subr.mxu0 0.0
      %1642 = vmatpush1.msra.mxu0 %v1639
      %1643 = vmatprep.subr.mxu0 0.0
      %1644 = vmatpush1.msra.mxu0 0.0
      %1645 = vmatprep.subr.mxu0 0.0
      %1646 = vmatpush1.msra.mxu0 0.0
      %1647 = vmatprep.subr.mxu0 0.0
      %1648 = vmatpush1.msra.mxu0 0.0
      %1649 = vmatprep.subr.mxu0 0.0
      %1650 = vmatpush1.msra.mxu0 0.0
      %1651 = vmatprep.subr.mxu0 0.0
      %1652 = vmatpush1.msra.mxu0 0.0
      %1653 = vmatprep.subr.mxu0 0.0
      %1654 = vmatpush1.msra.mxu0 0.0
      %1655 = vmatprep.subr.mxu0 0.0
      %1656 = vmatpush1.msra.mxu0 0.0
      %1657 = vmatprep.subr.mxu0 0.0
      %1658 = vmatpush1.msra.mxu0 0.0
      %1659 = vmatprep.subr.mxu0 0.0
      %1660 = vmatpush1.msra.mxu0 0.0
      %1661 = vmatprep.subr.mxu0 0.0
      %1662 = vmatpush1.msra.mxu0 0.0
      %1663 = vmatprep.subr.mxu0 0.0
      %1664 = vmatpush1.msra.mxu0 0.0
      %1665 = vmatprep.subr.mxu0 0.0
      %1666 = vmatpush1.msra.mxu0 0.0
      %1667 = vmatprep.subr.mxu0 0.0
      %1668 = vmatpush1.msra.mxu0 0.0
      %1669 = vmatprep.subr.mxu0 0.0
      %1670 = vmatpush1.msra.mxu0 0.0
      %1671 = vmatprep.subr.mxu0 0.0
      %1672 = vmatpush1.msra.mxu0 0.0
      %1673 = vmatprep.subr.mxu0 0.0
      %1674 = vmatpush1.msra.mxu0 0.0
      %1675 = vmatprep.subr.mxu0 0.0
      %1676 = vmatpush1.msra.mxu0 0.0
      %1677 = vmatprep.subr.mxu0 0.0
      %1678 = vmatpush1.msra.mxu0 0.0
      %1679 = vmatprep.subr.mxu0 0.0
      %1680 = vmatpush1.msra.mxu0 0.0
      %1681 = vmatprep.subr.mxu0 0.0
      %1682 = vmatpush1.msra.mxu0 0.0
      %1683 = vmatprep.subr.mxu0 0.0
      %1684 = vmatpush1.msra.mxu0 0.0
      %1685 = vmatprep.subr.mxu0 0.0
      %1686 = vmatpush1.msra.mxu0 0.0
      %1687 = vmatprep.subr.mxu0 0.0
      %1688 = vmatpush1.msra.mxu0 0.0
      %1689 = vmatprep.subr.mxu0 0.0
      %1690 = vmatpush1.msra.mxu0 0.0
      %1691 = vmatprep.subr.mxu0 0.0
      %1692 = vmatpush1.msra.mxu0 0.0
      %1693 = vmatprep.subr.mxu0 0.0
      %1694 = vmatpush1.msra.mxu0 0.0
      %1695 = vmatprep.subr.mxu0 0.0
      %1696 = vmatpush1.msra.mxu0 0.0
      %1697 = vmatprep.subr.mxu0 0.0
      %1698 = vmatpush1.msra.mxu0 0.0
      %1699 = vmatprep.subr.mxu0 0.0
      %1700 = vmatpush1.msra.mxu0 0.0
      %1701 = vmatprep.subr.mxu0 0.0
      %1702 = vmatpush1.msra.mxu0 0.0
      %1703 = vmatprep.subr.mxu0 0.0
      %1704 = vmatpush1.msra.mxu0 0.0
      %1705 = vmatprep.mubr.f32.mxu0 0.0
      %1706 = vmatmul.mubr.f32.gmra.mrb[0].mxu0 %v1590
      %v1707 = vpop.f32.mrb[0].mxu0
      %v1708 = vadd.f32 %v1587, %v1707
      %v1709 = vpop.f32.mrb[0].mxu0
      %1710 = vmatprep.mubr.f32.mxu0 0.0
      %1711 = vmatmul.mubr.f32.gmra.mrb[0].mxu0 %v1593
      %v1712 = vpop.f32.mrb[0].mxu0
      %v1713 = vadd.f32 %v1587, %v1712
      %v1714 = vpop.f32.mrb[0].mxu0
      %1715 = vmatprep.mubr.f32.mxu0 0.0
      %1716 = vmatmul.mubr.f32.gmra.mrb[0].mxu0 %v1596
      %v1717 = vpop.f32.mrb[0].mxu0
      %v1718 = vadd.f32 %v1587, %v1717
      %v1719 = vpop.f32.mrb[0].mxu0
      %1720 = vmatprep.mubr.f32.mxu0 0.0
      %1721 = vmatmul.mubr.f32.gmra.mrb[0].mxu0 %v1599
      %v1722 = vpop.f32.mrb[0].mxu0
      %v1723 = vadd.f32 %v1587, %v1722
      %v1724 = vpop.f32.mrb[0].mxu0
      %1725 = vmatprep.mubr.f32.mxu0 0.0
      %1726 = vmatmul.mubr.f32.gmra.mrb[0].mxu0 %v1602
      %v1727 = vpop.f32.mrb[0].mxu0
      %v1728 = vadd.f32 %v1587, %v1727
      %v1729 = vpop.f32.mrb[0].mxu0
      %1730 = vmatprep.mubr.f32.mxu0 0.0
      %1731 = vmatmul.mubr.f32.gmra.mrb[0].mxu0 %v1605
      %v1732 = vpop.f32.mrb[0].mxu0
      %v1733 = vadd.f32 %v1587, %v1732
      %v1734 = vpop.f32.mrb[0].mxu0
      %1735 = vmatprep.mubr.f32.mxu0 0.0
      %1736 = vmatmul.mubr.f32.gmra.mrb[0].mxu0 %v1608
      %v1737 = vpop.f32.mrb[0].mxu0
      %v1738 = vadd.f32 %v1587, %v1737
      %v1739 = vpop.f32.mrb[0].mxu0
      %1740 = vmatprep.mubr.f32.mxu0 0.0
      %1741 = vmatmul.mubr.f32.gmra.mrb[0].mxu0 %v1611
      %v1742 = vpop.f32.mrb[0].mxu0
      %v1743 = vadd.f32 %v1587, %v1742
      %v1744 = vpop.f32.mrb[0].mxu0
      %1745 = vmatprep.mubr.f32.mxu0 0.0
      %1746 = vmatmul.mubr.f32.gmra.mrb[0].mxu0 %v1614
      %v1747 = vpop.f32.mrb[0].mxu0
      %v1748 = vadd.f32 %v1587, %v1747
      %v1749 = vpop.f32.mrb[0].mxu0
      %1750 = vmatprep.mubr.f32.mxu0 0.0
      %1751 = vmatmul.mubr.f32.gmra.mrb[0].mxu0 %v1617
      %v1752 = vpop.f32.mrb[0].mxu0
      %v1753 = vadd.f32 %v1587, %v1752
      %v1754 = vpop.f32.mrb[0].mxu0
      %1755 = vmatprep.mubr.f32.mxu0 0.0
      %1756 = vmatmul.mubr.f32.gmra.mrb[0].mxu0 %v1620
      %v1757 = vpop.f32.mrb[0].mxu0
      %v1758 = vadd.f32 %v1587, %v1757
      %v1759 = vpop.f32.mrb[0].mxu0
      %1760 = vmatprep.mubr.f32.mxu0 0.0
      %1761 = vmatmul.mubr.f32.gmra.mrb[0].mxu0 %v1623
      %v1762 = vpop.f32.mrb[0].mxu0
      %v1763 = vadd.f32 %v1587, %v1762
      %v1764 = vpop.f32.mrb[0].mxu0
      %1765 = vmatprep.mubr.f32.mxu0 0.0
      %1766 = vmatmul.mubr.f32.gmra.mrb[0].mxu0 %v1626
      %v1767 = vpop.f32.mrb[0].mxu0
      %v1768 = vadd.f32 %v1587, %v1767
      %v1769 = vpop.f32.mrb[0].mxu0
      %1770 = vmatprep.mubr.f32.mxu0 0.0
      %1771 = vmatmul.mubr.f32.gmra.mrb[0].mxu0 %v1629
      %v1772 = vpop.f32.mrb[0].mxu0
      %v1773 = vadd.f32 %v1587, %v1772
      %v1774 = vpop.f32.mrb[0].mxu0
      %1775 = vmatprep.mubr.f32.mxu0 0.0
      %1776 = vmatmul.mubr.f32.gmra.mrb[0].mxu0 %v1632
      %v1777 = vpop.f32.mrb[0].mxu0
      %v1778 = vadd.f32 %v1587, %v1777
      %v1779 = vpop.f32.mrb[0].mxu0
      %1780 = vmatprep.mubr.f32.mxu0 0.0
      %1781 = vmatmul.mubr.f32.gmra.mrb[0].mxu0 %v1635
      %v1782 = vpop.f32.mrb[0].mxu0
      %v1783 = vadd.f32 %v1587, %v1782
      %v1784 = vpop.f32.mrb[0].mxu0
      %1785 = vdwg.mxu0
      %v1786 = vadd.f32 %v1708, %v755
      %v1787 = vadd.f32 %v1713, %v756
      %v1788 = vadd.f32 %v1718, %v757
      %v1789 = vadd.f32 %v1723, %v758
      %v1790 = vadd.f32 %v1728, %v759
      %v1791 = vadd.f32 %v1733, %v760
      %v1792 = vadd.f32 %v1738, %v761
      %v1793 = vadd.f32 %v1743, %v762
      %v1794 = vadd.f32 %v1748, %v763
      %v1795 = vadd.f32 %v1753, %v764
      %v1796 = vadd.f32 %v1758, %v765
      %v1797 = vadd.f32 %v1763, %v766
      %v1798 = vadd.f32 %v1768, %v767
      %v1799 = vadd.f32 %v1773, %v768
      %v1800 = vadd.f32 %v1778, %v769
      %v1801 = vadd.f32 %v1783, %v770
      %1802 = vst.msk [vmem:[%s300] sm:$0xff] %vm779, %v1786
      %1803 = vst.msk [vmem:[%s300 + $0x8] sm:$0xff] %vm779, %v1787
      %1804 = vst.msk [vmem:[%s300 + $0x10] sm:$0xff] %vm779, %v1788
      %1805 = vst.msk [vmem:[%s300 + $0x18] sm:$0xff] %vm779, %v1789
      %1806 = vst.msk [vmem:[%s300 + $0x20] sm:$0xff] %vm779, %v1790
      %1807 = vst.msk [vmem:[%s300 + $0x28] sm:$0xff] %vm779, %v1791
      %1808 = vst.msk [vmem:[%s300 + $0x30] sm:$0xff] %vm779, %v1792
      %1809 = vst.msk [vmem:[%s300 + $0x38] sm:$0xff] %vm779, %v1793
      %1810 = vst.msk [vmem:[%s300 + $0x40] sm:$0xff] %vm779, %v1794
      %1811 = vst.msk [vmem:[%s300 + $0x48] sm:$0xff] %vm779, %v1795
      %1812 = vst.msk [vmem:[%s300 + $0x50] sm:$0xff] %vm779, %v1796
      %1813 = vst.msk [vmem:[%s300 + $0x58] sm:$0xff] %vm779, %v1797
      %1814 = vst.msk [vmem:[%s300 + $0x60] sm:$0xff] %vm779, %v1798
      %1815 = vst.msk [vmem:[%s300 + $0x68] sm:$0xff] %vm779, %v1799
      %1816 = vst.msk [vmem:[%s300 + $0x70] sm:$0xff] %vm779, %v1800
      %1817 = vst.msk [vmem:[%s300 + $0x78] sm:$0xff] %vm779, %v1801
      %s1818 = smul.u32 16, %s23
      %p1819 = scmp.lt.s32.totalorder %s22, 1
      %s1820 = scalar_select %p1819, %s22, 1
      %p1821 = scmp.lt.s32.totalorder %s1818, 31
      %s1822 = scalar_select %p1821, %s1818, 31
      %s1823 = smul.addr %s1820, 32
      %s1824 = sadd.s32 %s1822, %s1823
      %s1825 = smul.addr %s1824, 8
      %s1826 = scalar_lea.vmem %s7, %s1825
      // Predicated region
      $region53: #{tpu_custom_call.1} parent=47 // pred_check
        %p1827 = pneg %p202
      $region54: #{tpu_custom_call.1} parent=47 // pred_check_branch
        %1829 = sbr.rel (%p1827) target = $region56
      $region55: #{tpu_custom_call.1} parent=47 // pred_region
        %s1830 = smul.u32 16, %s23
      $region56: #{tpu_custom_call.1} parent=47 // pred_fallthru
        _
    $region48: #{tpu_custom_call.1} parent=5 // pred_fallthru
      _
    %p1831 = scmp.le.s32.totalorder 2, %s13
    // Predicated region
    $region57: #{tpu_custom_call.1} parent=5 // pred_check
      %p1832 = pneg %p1831
    $region58: #{tpu_custom_call.1} parent=5 // pred_check_branch
      %1834 = sbr.rel (%p1832) target = $region60
    $region59: #{tpu_custom_call.1} parent=5 // pred_region
      %s1835 = ssub.s32 %s13, 2
      // Predicated region
      $region61: #{tpu_custom_call.1} parent=59 // pred_check
        %p1836 = pneg %p208
      $region62: #{tpu_custom_call.1} parent=59 // pred_check_branch
        %1838 = sbr.rel (%p1836) target = $region64
      $region63: #{tpu_custom_call.1} parent=59 // pred_region
        %s1839 = smul.u32 16, %s25
        %p1840 = scmp.lt.s32.totalorder %s24, 1
        %s1841 = scalar_select %p1840, %s24, 1
        %p1842 = scmp.lt.s32.totalorder %s1839, 31
        %s1843 = scalar_select %p1842, %s1839, 31
        %s1844 = smul.addr %s1841, 32
        %s1845 = sadd.s32 %s1843, %s1844
        %s1846 = smul.addr %s1845, 8
        %s1847 = scalar_lea.vmem %s7, %s1846
      $region64: #{tpu_custom_call.1} parent=59 // pred_fallthru
        _
    $region60: #{tpu_custom_call.1} parent=5 // pred_fallthru
      _
  $region6: #{tpu_custom_call.1} parent=0 // loop_footer
    %s17 = sadd.s32 1, %s13
  $region7: #{tpu_custom_call.1} parent=0 // loop_footer_branch
    %12 = sbr.rel target = $region3
  $region8: #{tpu_custom_call.1} parent=0 // loop_exit
    _

</llo_original>
